<compile_context>
chip_gen: v5e
topology: v5e:2x2
jax: 0.10.0
libtpu: 0.0.40
codegen_flags: <defaults>
</compile_context>

<pallas_src>
import numpy as np
import jax
import jax.numpy as jnp
from jax.experimental import pallas as pl
from jax.experimental.pallas import tpu as pltpu

S_PAD = 8               # pyramid sizes (1,2,3,6) padded to a common 8
S2 = S_PAD * S_PAD      # flattened pooled spatial size (zero-padded region is
                        # killed by the zero columns of AA)


def adaptive_pool_matrix(size, dim):
    """Averaging matrix P (S_PAD, dim) matching nn.AdaptiveAvgPool2d bins."""
    P = np.zeros((S_PAD, dim), np.float32)
    for i in range(size):
        start = (i * dim) // size
        end = -((-(i + 1) * dim) // size)  # ceil((i+1)*dim/size)
        P[i, start:end] = 1.0 / float(end - start)
    return P


def bilinear_upsample_matrix(size, dim):
    """Interp matrix A (dim, S_PAD); matches F.interpolate bilinear, align_corners=False."""
    A = np.zeros((dim, S_PAD), np.float32)
    if size == 1:
        A[:, 0] = 1.0
        return A
    scale = size / dim
    for o in range(dim):
        src = max((o + 0.5) * scale - 0.5, 0.0)
        i0 = min(int(np.floor(src)), size - 1)
        i1 = min(i0 + 1, size - 1)
        lam = src - i0
        A[o, i0] += 1.0 - lam
        A[o, i1] += lam
    return A


def make_psp_kernel(NB):
    def kernel(x_ref, pp_ref, aa_ref, scale_ref, shift_ref, w_ref, out_ref):
        x = x_ref[0]                                   # (H*W, C), C on lanes
        parts = []
        for k in range(NB):                            # static loop, NB = 4 branches
            # adaptive avg-pool over both spatial axes: one MXU matmul
            pooled = jnp.dot(pp_ref[k], x,
                             preferred_element_type=jnp.float32)        # (S2, C)
            # inference BatchNorm + ReLU: lane-vector scale/shift, one vmul+vadd
            y = jnp.maximum(pooled * scale_ref[k] + shift_ref[k], 0.0)   # (S2, C)
            # 1x1 conv (no bias): one MXU matmul over the channel axis
            z = jnp.dot(y, w_ref[k],
                        preferred_element_type=jnp.float32)              # (S2, CQ)
            # bilinear upsample over both spatial axes: one MXU matmul
            up = jnp.dot(aa_ref[k], z,
                         preferred_element_type=jnp.float32)             # (H*W, CQ)
            parts.append(up)
        parts.append(x)                                # identity branch (bulk copy)
        # single lane-dense store of the full (H*W, NB*CQ + C) slab
        out_ref[0] = jnp.concatenate(parts, axis=-1)
    return kernel


def psp_forward(x_nchw, Ps, As, scale, shift, conv_w,
                *, vmem_limit_bytes=32 * 1024 * 1024):
    B, C, H, W = x_nchw.shape
    assert H == W, "square spatial dims assumed (P/A reused on both axes)"
    NB = Ps.shape[0]
    CQ = conv_w.shape[-1]
    COUT = NB * CQ + C
    HW = H * W

    # Fold the two separable spatial contractions into single Kronecker operators
    # so pooling / upsampling are one matmul each with channels on the lane axis.
    PP = jnp.stack([jnp.kron(Ps[k], Ps[k]) for k in range(NB)])   # (NB, S2, HW)
    AA = jnp.stack([jnp.kron(As[k], As[k]) for k in range(NB)])   # (NB, HW, S2)

    # NCHW -> (B, H*W, C): spatial flattened onto rows, channels lane-dense.
    x_flat = jnp.transpose(x_nchw, (0, 2, 3, 1)).reshape(B, HW, C).astype(jnp.float32)
    scale3 = scale.reshape(NB, 1, C).astype(jnp.float32)          # lane vectors (VMEM)
    shift3 = shift.reshape(NB, 1, C).astype(jnp.float32)
    w = conv_w.astype(jnp.float32)                                # (NB, C, CQ) in VMEM

    kernel = make_psp_kernel(NB)

    def full(shape):
        return pl.BlockSpec(shape, lambda b: (0,) * len(shape))

    out_flat = pl.pallas_call(
        kernel,
        grid=(B,),
        in_specs=[
            pl.BlockSpec((1, HW, C), lambda b: (b, 0, 0)),  # x (one batch element)
            full((NB, S2, HW)),    # PP  = kron(P, P) per branch
            full((NB, HW, S2)),    # AA  = kron(A, A) per branch
            full((NB, 1, C)),      # BN scale (lane vectors)
            full((NB, 1, C)),      # BN shift (lane vectors)
            full((NB, C, CQ)),     # 1x1 conv weights
        ],
        out_specs=pl.BlockSpec((1, HW, COUT), lambda b: (b, 0, 0)),
        out_shape=jax.ShapeDtypeStruct((B, HW, COUT), jnp.float32),
        compiler_params=pltpu.CompilerParams(
            dimension_semantics=("parallel",),
            vmem_limit_bytes=vmem_limit_bytes,
        ),
    )(x_flat, PP, AA, scale3, shift3, w)

    # (B, H*W, COUT) -> NCHW to match the PyTorch convention.
    return jnp.transpose(out_flat.reshape(B, H, W, COUT), (0, 3, 1, 2))


def psp_reference(x_nchw, Ps, As, scale, shift, conv_w):
    """Pure-JAX reference using the separable P/A matrices (not the kron form)."""
    B, C, H, W = x_nchw.shape
    NB = Ps.shape[0]
    x = jnp.transpose(x_nchw, (0, 2, 3, 1)).astype(jnp.float32)
    outs = []
    for k in range(NB):
        P, A = Ps[k], As[k]
        pooled = jnp.einsum('ih,bhwc->biwc', P, x)
        pooled = jnp.einsum('jw,biwc->bijc', P, pooled)
        y = jnp.maximum(pooled * scale[k] + shift[k], 0.0)
        z = jnp.einsum('bijc,cd->bijd', y, conv_w[k])
        up = jnp.einsum('hi,bijd->bhjd', A, z)
        up = jnp.einsum('wj,bhjd->bhwd', A, up)
        outs.append(up)
    outs.append(x)
    return jnp.transpose(jnp.concatenate(outs, axis=-1), (0, 3, 1, 2))


if __name__ == "__main__":
    key = jax.random.PRNGKey(0)
    B, C, H, W = 2, 4, 16, 16
    sizes = (1, 2, 3, 6)
    NB = len(sizes)
    CQ = C // NB  # num_features / len(size_series)

    k_x, k_g, k_b, k_m, k_v, k_w = jax.random.split(key, 6)
    x = jax.random.normal(k_x, (B, C, H, W), jnp.float32)

    # deterministic synthetic parameters (per-branch BN + 1x1 conv weights)
    gamma = jax.random.uniform(k_g, (NB, C), jnp.float32, 0.5, 1.5)
    beta = 0.1 * jax.random.normal(k_b, (NB, C), jnp.float32)
    run_mean = 0.1 * jax.random.normal(k_m, (NB, C), jnp.float32)
    run_var = jax.random.uniform(k_v, (NB, C), jnp.float32, 0.5, 1.5)
    conv_w = jax.random.normal(k_w, (NB, C, CQ), jnp.float32) / np.sqrt(C)

    eps = 1e-5
    scale = gamma / jnp.sqrt(run_var + eps)
    shift = beta - run_mean * scale

    Ps = jnp.asarray(np.stack([adaptive_pool_matrix(s, H) for s in sizes]))
    As = jnp.asarray(np.stack([bilinear_upsample_matrix(s, H) for s in sizes]))

    out = jax.block_until_ready(psp_forward(x, Ps, As, scale, shift, conv_w))
    ref = jax.block_until_ready(psp_reference(x, Ps, As, scale, shift, conv_w))

    assert out.shape == (B, NB * CQ + C, H, W)
    np.testing.assert_allclose(np.asarray(out), np.asarray(ref), rtol=1e-5, atol=1e-5)
    print("KERNEL_OK")
</pallas_src>

<mosaic_0001>
module attributes {stable_mosaic.version = 11 : i64} {
  func.func @kernel(%arg0: i32, %arg1: memref<1x256x4xf32, #tpu.memory_space<vmem>>, %arg2: memref<4x64x256xf32, #tpu.memory_space<vmem>>, %arg3: memref<4x256x64xf32, #tpu.memory_space<vmem>>, %arg4: memref<4x1x4xf32, #tpu.memory_space<vmem>>, %arg5: memref<4x1x4xf32, #tpu.memory_space<vmem>>, %arg6: memref<4x4x1xf32, #tpu.memory_space<vmem>>, %arg7: memref<1x256x8xf32, #tpu.memory_space<vmem>>) attributes {dimension_semantics = [#tpu.dimension_semantics<parallel>], iteration_bounds = array<i64: 2>, scalar_prefetch = 0 : i64, scratch_operands = 0 : i64, tpu.core_type = #tpu.core_type<tc>, window_params = [{transform_indices = @transform_0, window_bounds = array<i64: 1, 256, 4>}, {pipeline_mode = #tpu.pipeline_mode<synchronous>, transform_indices = @transform_1, window_bounds = array<i64: 4, 64, 256>}, {pipeline_mode = #tpu.pipeline_mode<synchronous>, transform_indices = @transform_2, window_bounds = array<i64: 4, 256, 64>}, {pipeline_mode = #tpu.pipeline_mode<synchronous>, transform_indices = @transform_3, window_bounds = array<i64: 4, 1, 4>}, {pipeline_mode = #tpu.pipeline_mode<synchronous>, transform_indices = @transform_4, window_bounds = array<i64: 4, 1, 4>}, {pipeline_mode = #tpu.pipeline_mode<synchronous>, transform_indices = @transform_5, window_bounds = array<i64: 4, 4, 1>}, {transform_indices = @transform_6, window_bounds = array<i64: 1, 256, 8>}]} {
    %c0 = arith.constant 0 : index
    %c0_0 = arith.constant 0 : index
    %c0_1 = arith.constant 0 : index
    %0 = vector.load %arg1[%c0, %c0_0, %c0_1] : memref<1x256x4xf32, #tpu.memory_space<vmem>>, vector<1x256x4xf32>
    %1 = vector.shape_cast %0 : vector<1x256x4xf32> to vector<256x4xf32>
    %c0_2 = arith.constant 0 : index
    %c0_3 = arith.constant 0 : index
    %c0_4 = arith.constant 0 : index
    %2 = vector.load %arg2[%c0_2, %c0_3, %c0_4] : memref<4x64x256xf32, #tpu.memory_space<vmem>>, vector<1x64x256xf32>
    %3 = vector.shape_cast %2 : vector<1x64x256xf32> to vector<64x256xf32>
    %cst = arith.constant dense<0.000000e+00> : vector<64x4xf32>
    %4 = tpu.matmul %3, %1, %cst {dimension_numbers = #tpu.dot_dimension_numbers<[1], [0], [0], [1], [0, 0, 1, 1], [], []>} : vector<64x256xf32>, vector<256x4xf32>, vector<64x4xf32> -> vector<64x4xf32>
    %c0_5 = arith.constant 0 : index
    %c0_6 = arith.constant 0 : index
    %c0_7 = arith.constant 0 : index
    %5 = vector.load %arg4[%c0_5, %c0_6, %c0_7] : memref<4x1x4xf32, #tpu.memory_space<vmem>>, vector<1x1x4xf32>
    %6 = vector.shape_cast %5 : vector<1x1x4xf32> to vector<1x4xf32>
    %7 = vector.broadcast %6 : vector<1x4xf32> to vector<64x4xf32>
    %8 = arith.mulf %4, %7 : vector<64x4xf32>
    %c0_8 = arith.constant 0 : index
    %c0_9 = arith.constant 0 : index
    %c0_10 = arith.constant 0 : index
    %9 = vector.load %arg5[%c0_8, %c0_9, %c0_10] : memref<4x1x4xf32, #tpu.memory_space<vmem>>, vector<1x1x4xf32>
    %10 = vector.shape_cast %9 : vector<1x1x4xf32> to vector<1x4xf32>
    %11 = vector.broadcast %10 : vector<1x4xf32> to vector<64x4xf32>
    %12 = arith.addf %8, %11 : vector<64x4xf32>
    %cst_11 = arith.constant 0.000000e+00 : f32
    %13 = vector.broadcast %cst_11 : f32 to vector<64x4xf32>
    %14 = arith.maximumf %12, %13 : vector<64x4xf32>
    %c0_12 = arith.constant 0 : index
    %c0_13 = arith.constant 0 : index
    %c0_14 = arith.constant 0 : index
    %15 = vector.load %arg6[%c0_12, %c0_13, %c0_14] : memref<4x4x1xf32, #tpu.memory_space<vmem>>, vector<1x4x1xf32>
    %16 = vector.shape_cast %15 : vector<1x4x1xf32> to vector<4x1xf32>
    %cst_15 = arith.constant dense<0.000000e+00> : vector<64x1xf32>
    %17 = tpu.matmul %14, %16, %cst_15 {dimension_numbers = #tpu.dot_dimension_numbers<[1], [0], [0], [1], [0, 0, 1, 1], [], []>} : vector<64x4xf32>, vector<4x1xf32>, vector<64x1xf32> -> vector<64x1xf32>
    %c0_16 = arith.constant 0 : index
    %c0_17 = arith.constant 0 : index
    %c0_18 = arith.constant 0 : index
    %18 = vector.load %arg3[%c0_16, %c0_17, %c0_18] : memref<4x256x64xf32, #tpu.memory_space<vmem>>, vector<1x256x64xf32>
    %19 = vector.shape_cast %18 : vector<1x256x64xf32> to vector<256x64xf32>
    %cst_19 = arith.constant dense<0.000000e+00> : vector<256x1xf32>
    %20 = tpu.matmul %19, %17, %cst_19 {dimension_numbers = #tpu.dot_dimension_numbers<[1], [0], [0], [1], [0, 0, 1, 1], [], []>} : vector<256x64xf32>, vector<64x1xf32>, vector<256x1xf32> -> vector<256x1xf32>
    %c1 = arith.constant 1 : index
    %c0_20 = arith.constant 0 : index
    %c0_21 = arith.constant 0 : index
    %21 = vector.load %arg2[%c1, %c0_20, %c0_21] : memref<4x64x256xf32, #tpu.memory_space<vmem>>, vector<1x64x256xf32>
    %22 = vector.shape_cast %21 : vector<1x64x256xf32> to vector<64x256xf32>
    %cst_22 = arith.constant dense<0.000000e+00> : vector<64x4xf32>
    %23 = tpu.matmul %22, %1, %cst_22 {dimension_numbers = #tpu.dot_dimension_numbers<[1], [0], [0], [1], [0, 0, 1, 1], [], []>} : vector<64x256xf32>, vector<256x4xf32>, vector<64x4xf32> -> vector<64x4xf32>
    %c1_23 = arith.constant 1 : index
    %c0_24 = arith.constant 0 : index
    %c0_25 = arith.constant 0 : index
    %24 = vector.load %arg4[%c1_23, %c0_24, %c0_25] : memref<4x1x4xf32, #tpu.memory_space<vmem>>, vector<1x1x4xf32>
    %25 = vector.shape_cast %24 : vector<1x1x4xf32> to vector<1x4xf32>
    %26 = vector.broadcast %25 : vector<1x4xf32> to vector<64x4xf32>
    %27 = arith.mulf %23, %26 : vector<64x4xf32>
    %c1_26 = arith.constant 1 : index
    %c0_27 = arith.constant 0 : index
    %c0_28 = arith.constant 0 : index
    %28 = vector.load %arg5[%c1_26, %c0_27, %c0_28] : memref<4x1x4xf32, #tpu.memory_space<vmem>>, vector<1x1x4xf32>
    %29 = vector.shape_cast %28 : vector<1x1x4xf32> to vector<1x4xf32>
    %30 = vector.broadcast %29 : vector<1x4xf32> to vector<64x4xf32>
    %31 = arith.addf %27, %30 : vector<64x4xf32>
    %cst_29 = arith.constant 0.000000e+00 : f32
    %32 = vector.broadcast %cst_29 : f32 to vector<64x4xf32>
    %33 = arith.maximumf %31, %32 : vector<64x4xf32>
    %c1_30 = arith.constant 1 : index
    %c0_31 = arith.constant 0 : index
    %c0_32 = arith.constant 0 : index
    %34 = vector.load %arg6[%c1_30, %c0_31, %c0_32] : memref<4x4x1xf32, #tpu.memory_space<vmem>>, vector<1x4x1xf32>
    %35 = vector.shape_cast %34 : vector<1x4x1xf32> to vector<4x1xf32>
    %cst_33 = arith.constant dense<0.000000e+00> : vector<64x1xf32>
    %36 = tpu.matmul %33, %35, %cst_33 {dimension_numbers = #tpu.dot_dimension_numbers<[1], [0], [0], [1], [0, 0, 1, 1], [], []>} : vector<64x4xf32>, vector<4x1xf32>, vector<64x1xf32> -> vector<64x1xf32>
    %c1_34 = arith.constant 1 : index
    %c0_35 = arith.constant 0 : index
    %c0_36 = arith.constant 0 : index
    %37 = vector.load %arg3[%c1_34, %c0_35, %c0_36] : memref<4x256x64xf32, #tpu.memory_space<vmem>>, vector<1x256x64xf32>
    %38 = vector.shape_cast %37 : vector<1x256x64xf32> to vector<256x64xf32>
    %cst_37 = arith.constant dense<0.000000e+00> : vector<256x1xf32>
    %39 = tpu.matmul %38, %36, %cst_37 {dimension_numbers = #tpu.dot_dimension_numbers<[1], [0], [0], [1], [0, 0, 1, 1], [], []>} : vector<256x64xf32>, vector<64x1xf32>, vector<256x1xf32> -> vector<256x1xf32>
    %c2 = arith.constant 2 : index
    %c0_38 = arith.constant 0 : index
    %c0_39 = arith.constant 0 : index
    %40 = vector.load %arg2[%c2, %c0_38, %c0_39] : memref<4x64x256xf32, #tpu.memory_space<vmem>>, vector<1x64x256xf32>
    %41 = vector.shape_cast %40 : vector<1x64x256xf32> to vector<64x256xf32>
    %cst_40 = arith.constant dense<0.000000e+00> : vector<64x4xf32>
    %42 = tpu.matmul %41, %1, %cst_40 {dimension_numbers = #tpu.dot_dimension_numbers<[1], [0], [0], [1], [0, 0, 1, 1], [], []>} : vector<64x256xf32>, vector<256x4xf32>, vector<64x4xf32> -> vector<64x4xf32>
    %c2_41 = arith.constant 2 : index
    %c0_42 = arith.constant 0 : index
    %c0_43 = arith.constant 0 : index
    %43 = vector.load %arg4[%c2_41, %c0_42, %c0_43] : memref<4x1x4xf32, #tpu.memory_space<vmem>>, vector<1x1x4xf32>
    %44 = vector.shape_cast %43 : vector<1x1x4xf32> to vector<1x4xf32>
    %45 = vector.broadcast %44 : vector<1x4xf32> to vector<64x4xf32>
    %46 = arith.mulf %42, %45 : vector<64x4xf32>
    %c2_44 = arith.constant 2 : index
    %c0_45 = arith.constant 0 : index
    %c0_46 = arith.constant 0 : index
    %47 = vector.load %arg5[%c2_44, %c0_45, %c0_46] : memref<4x1x4xf32, #tpu.memory_space<vmem>>, vector<1x1x4xf32>
    %48 = vector.shape_cast %47 : vector<1x1x4xf32> to vector<1x4xf32>
    %49 = vector.broadcast %48 : vector<1x4xf32> to vector<64x4xf32>
    %50 = arith.addf %46, %49 : vector<64x4xf32>
    %cst_47 = arith.constant 0.000000e+00 : f32
    %51 = vector.broadcast %cst_47 : f32 to vector<64x4xf32>
    %52 = arith.maximumf %50, %51 : vector<64x4xf32>
    %c2_48 = arith.constant 2 : index
    %c0_49 = arith.constant 0 : index
    %c0_50 = arith.constant 0 : index
    %53 = vector.load %arg6[%c2_48, %c0_49, %c0_50] : memref<4x4x1xf32, #tpu.memory_space<vmem>>, vector<1x4x1xf32>
    %54 = vector.shape_cast %53 : vector<1x4x1xf32> to vector<4x1xf32>
    %cst_51 = arith.constant dense<0.000000e+00> : vector<64x1xf32>
    %55 = tpu.matmul %52, %54, %cst_51 {dimension_numbers = #tpu.dot_dimension_numbers<[1], [0], [0], [1], [0, 0, 1, 1], [], []>} : vector<64x4xf32>, vector<4x1xf32>, vector<64x1xf32> -> vector<64x1xf32>
    %c2_52 = arith.constant 2 : index
    %c0_53 = arith.constant 0 : index
    %c0_54 = arith.constant 0 : index
    %56 = vector.load %arg3[%c2_52, %c0_53, %c0_54] : memref<4x256x64xf32, #tpu.memory_space<vmem>>, vector<1x256x64xf32>
    %57 = vector.shape_cast %56 : vector<1x256x64xf32> to vector<256x64xf32>
    %cst_55 = arith.constant dense<0.000000e+00> : vector<256x1xf32>
    %58 = tpu.matmul %57, %55, %cst_55 {dimension_numbers = #tpu.dot_dimension_numbers<[1], [0], [0], [1], [0, 0, 1, 1], [], []>} : vector<256x64xf32>, vector<64x1xf32>, vector<256x1xf32> -> vector<256x1xf32>
    %c3 = arith.constant 3 : index
    %c0_56 = arith.constant 0 : index
    %c0_57 = arith.constant 0 : index
    %59 = vector.load %arg2[%c3, %c0_56, %c0_57] : memref<4x64x256xf32, #tpu.memory_space<vmem>>, vector<1x64x256xf32>
    %60 = vector.shape_cast %59 : vector<1x64x256xf32> to vector<64x256xf32>
    %cst_58 = arith.constant dense<0.000000e+00> : vector<64x4xf32>
    %61 = tpu.matmul %60, %1, %cst_58 {dimension_numbers = #tpu.dot_dimension_numbers<[1], [0], [0], [1], [0, 0, 1, 1], [], []>} : vector<64x256xf32>, vector<256x4xf32>, vector<64x4xf32> -> vector<64x4xf32>
    %c3_59 = arith.constant 3 : index
    %c0_60 = arith.constant 0 : index
    %c0_61 = arith.constant 0 : index
    %62 = vector.load %arg4[%c3_59, %c0_60, %c0_61] : memref<4x1x4xf32, #tpu.memory_space<vmem>>, vector<1x1x4xf32>
    %63 = vector.shape_cast %62 : vector<1x1x4xf32> to vector<1x4xf32>
    %64 = vector.broadcast %63 : vector<1x4xf32> to vector<64x4xf32>
    %65 = arith.mulf %61, %64 : vector<64x4xf32>
    %c3_62 = arith.constant 3 : index
    %c0_63 = arith.constant 0 : index
    %c0_64 = arith.constant 0 : index
    %66 = vector.load %arg5[%c3_62, %c0_63, %c0_64] : memref<4x1x4xf32, #tpu.memory_space<vmem>>, vector<1x1x4xf32>
    %67 = vector.shape_cast %66 : vector<1x1x4xf32> to vector<1x4xf32>
    %68 = vector.broadcast %67 : vector<1x4xf32> to vector<64x4xf32>
    %69 = arith.addf %65, %68 : vector<64x4xf32>
    %cst_65 = arith.constant 0.000000e+00 : f32
    %70 = vector.broadcast %cst_65 : f32 to vector<64x4xf32>
    %71 = arith.maximumf %69, %70 : vector<64x4xf32>
    %c3_66 = arith.constant 3 : index
    %c0_67 = arith.constant 0 : index
    %c0_68 = arith.constant 0 : index
    %72 = vector.load %arg6[%c3_66, %c0_67, %c0_68] : memref<4x4x1xf32, #tpu.memory_space<vmem>>, vector<1x4x1xf32>
    %73 = vector.shape_cast %72 : vector<1x4x1xf32> to vector<4x1xf32>
    %cst_69 = arith.constant dense<0.000000e+00> : vector<64x1xf32>
    %74 = tpu.matmul %71, %73, %cst_69 {dimension_numbers = #tpu.dot_dimension_numbers<[1], [0], [0], [1], [0, 0, 1, 1], [], []>} : vector<64x4xf32>, vector<4x1xf32>, vector<64x1xf32> -> vector<64x1xf32>
    %c3_70 = arith.constant 3 : index
    %c0_71 = arith.constant 0 : index
    %c0_72 = arith.constant 0 : index
    %75 = vector.load %arg3[%c3_70, %c0_71, %c0_72] : memref<4x256x64xf32, #tpu.memory_space<vmem>>, vector<1x256x64xf32>
    %76 = vector.shape_cast %75 : vector<1x256x64xf32> to vector<256x64xf32>
    %cst_73 = arith.constant dense<0.000000e+00> : vector<256x1xf32>
    %77 = tpu.matmul %76, %74, %cst_73 {dimension_numbers = #tpu.dot_dimension_numbers<[1], [0], [0], [1], [0, 0, 1, 1], [], []>} : vector<256x64xf32>, vector<64x1xf32>, vector<256x1xf32> -> vector<256x1xf32>
    %78 = tpu.concatenate %20, %39, %58, %77, %1 in 1 : vector<256x1xf32>, vector<256x1xf32>, vector<256x1xf32>, vector<256x1xf32>, vector<256x4xf32> -> vector<256x8xf32>
    %c0_74 = arith.constant 0 : index
    %c0_75 = arith.constant 0 : index
    %c0_76 = arith.constant 0 : index
    %79 = vector.load %arg7[%c0_74, %c0_75, %c0_76] : memref<1x256x8xf32, #tpu.memory_space<vmem>>, vector<1x256x8xf32>
    %80 = vector.shape_cast %79 : vector<1x256x8xf32> to vector<256x8xf32>
    %81 = vector.shape_cast %78 : vector<256x8xf32> to vector<1x256x8xf32>
    tpu.vector_store %arg7[%c0_74, %c0_75, %c0_76], %81 {strides = array<i32>} : memref<1x256x8xf32, #tpu.memory_space<vmem>>, vector<1x256x8xf32>,
    return
  }
  func.func @transform_0(%arg0: i32) -> (i32, i32, i32) {
    %c0_i32 = arith.constant 0 : i32
    %c0_i32_0 = arith.constant 0 : i32
    %c0_i32_1 = arith.constant 0 : i32
    return %arg0, %c0_i32, %c0_i32_0 : i32, i32, i32
  }
  func.func @transform_1(%arg0: i32) -> (i32, i32, i32) {
    %c0_i32 = arith.constant 0 : i32
    %c0_i32_0 = arith.constant 0 : i32
    %c0_i32_1 = arith.constant 0 : i32
    %c0_i32_2 = arith.constant 0 : i32
    return %c0_i32, %c0_i32_0, %c0_i32_1 : i32, i32, i32
  }
  func.func @transform_2(%arg0: i32) -> (i32, i32, i32) {
    %c0_i32 = arith.constant 0 : i32
    %c0_i32_0 = arith.constant 0 : i32
    %c0_i32_1 = arith.constant 0 : i32
    %c0_i32_2 = arith.constant 0 : i32
    return %c0_i32, %c0_i32_0, %c0_i32_1 : i32, i32, i32
  }
  func.func @transform_3(%arg0: i32) -> (i32, i32, i32) {
    %c0_i32 = arith.constant 0 : i32
    %c0_i32_0 = arith.constant 0 : i32
    %c0_i32_1 = arith.constant 0 : i32
    %c0_i32_2 = arith.constant 0 : i32
    return %c0_i32, %c0_i32_0, %c0_i32_1 : i32, i32, i32
  }
  func.func @transform_4(%arg0: i32) -> (i32, i32, i32) {
    %c0_i32 = arith.constant 0 : i32
    %c0_i32_0 = arith.constant 0 : i32
    %c0_i32_1 = arith.constant 0 : i32
    %c0_i32_2 = arith.constant 0 : i32
    return %c0_i32, %c0_i32_0, %c0_i32_1 : i32, i32, i32
  }
  func.func @transform_5(%arg0: i32) -> (i32, i32, i32) {
    %c0_i32 = arith.constant 0 : i32
    %c0_i32_0 = arith.constant 0 : i32
    %c0_i32_1 = arith.constant 0 : i32
    %c0_i32_2 = arith.constant 0 : i32
    return %c0_i32, %c0_i32_0, %c0_i32_1 : i32, i32, i32
  }
  func.func @transform_6(%arg0: i32) -> (i32, i32, i32) {
    %c0_i32 = arith.constant 0 : i32
    %c0_i32_0 = arith.constant 0 : i32
    %c0_i32_1 = arith.constant 0 : i32
    return %arg0, %c0_i32, %c0_i32_0 : i32, i32, i32
  }
}

</mosaic_0001>

<llo_original>
// kernel: tpu_custom_call.1
$region0: #{tpu_custom_call.1}
  #allocation0 [shape = 'u32[]', space=smem, size = 0x4, offset = 0x4, fixed_abs, tag = 'smem constant byte address 0x4 - core index']
  #allocation1 [shape = 'u32[72,128]{1,0:T(1,128)}', space=vmem, size = 0x9000, scoped, tag = 'internal scratch']
  %s0 = inlined_call_operand.vmem [shape: f32[2,256,4], index: 0, kind: input, shape index: {}]
  %s1 = inlined_call_operand.vmem [shape: f32[4,64,256], index: 1, kind: input, shape index: {}]
  %s2 = inlined_call_operand.vmem [shape: f32[4,256,64], index: 2, kind: input, shape index: {}]
  %s3 = inlined_call_operand.vmem [shape: f32[4,1,4], index: 3, kind: input, shape index: {}]
  %s4 = inlined_call_operand.vmem [shape: f32[4,1,4], index: 4, kind: input, shape index: {}]
  %s5 = inlined_call_operand.vmem [shape: f32[4,4,1], index: 5, kind: input, shape index: {}]
  %s6 = inlined_call_operand.vmem [shape: f32[2,256,8], index: 6, kind: output, shape index: {}]
  %s7 = sld [smem:[#allocation0]]
  $region57: #{tpu_custom_call.1} parent=0
    _
  %s9 = ssub.s32 1, %s7
  %s10 = scalar_select 0, %s9, %s7
  loop: start=0, step=1, limit=4
  $region2: #{tpu_custom_call.1} parent=0 // loop_pre_header
    _
  $region3: #{tpu_custom_call.1} parent=0 // loop_header
    %s12 = sphi 0, %s16
    %p13 = scmp.ge.s32.totalorder %s12, 4
    %s22 = sphi 0, %s24
    %s25 = sphi 0, %s22
    %s26 = sphi 0, %s25
    %s42 = sphi 0, %s26
    %s46 = sphi 0, %s46
    %s48 = sphi 0, %s46
    %s49 = sphi 0, %s48
    %s63 = sphi 0, %s49
    %s67 = sphi 0, %s67
    %s69 = sphi 0, %s67
    %s70 = sphi 0, %s69
    %s84 = sphi 0, %s70
    %s88 = sphi 0, %s88
    %s90 = sphi 0, %s88
    %s91 = sphi 0, %s90
    %s105 = sphi 0, %s91
    %s109 = sphi 0, %s109
    %s111 = sphi 0, %s109
    %s112 = sphi 0, %s111
    %s126 = sphi 0, %s112
    %s130 = sphi 0, %s130
    %s132 = sphi 0, %s130
    %s133 = sphi 0, %s132
    %s147 = sphi 0, %s133
    %s153 = sphi 0, %s155
    %s156 = sphi 0, %s153
    %s157 = sphi 0, %s156
    %s173 = sphi 0, %s157
  $region4: #{tpu_custom_call.1} parent=0 // loop_header_branch
    %15 = sbr.rel (%p13) target = $region8
  $region5: #{tpu_custom_call.1} parent=0 // loop_body
    %s17 = ssub.s32 %s12, 1
    %s18 = ssub.s32 %s12, 2
    %s19 = sadd.s32 %s12, 1
    %s20 = ssub.s32 %s12, %s19
    %p21 = scmp.eq.s32.totalorder %s20, 0
    %s23 = sadd.s32 %s22, 1
    %s24 = scalar_select %p21, %s22, %s23
    %p27 = pneg %p21
    %p28 = scmp.eq.s32.totalorder %s12, 1
    %p29 = por %p27, %p28
    %p30 = scmp.ne.s32.totalorder %s22, %s25
    %p31 = scmp.eq.s32.totalorder %s12, 0
    %p32 = por %p30, %p31
    %p33 = scmp.ne.s32.totalorder %s22, %s25
    %p34 = scmp.eq.s32.totalorder %s17, 1
    %p35 = por %p33, %p34
    %p36 = scmp.ne.s32.totalorder %s25, %s26
    %p37 = scmp.eq.s32.totalorder %s17, 0
    %p38 = por %p36, %p37
    %p39 = scmp.ne.s32.totalorder %s25, %s26
    %p40 = scmp.eq.s32.totalorder %s18, 1
    %p41 = por %p39, %p40
    %p43 = scmp.ne.s32.totalorder %s26, %s42
    %p44 = scmp.eq.s32.totalorder %s18, 0
    %p45 = por %p43, %p44
    %s47 = sadd.s32 %s46, 1
    %p50 = scmp.eq.s32.totalorder %s12, 1
    %p51 = scmp.ne.s32.totalorder %s46, %s48
    %p52 = scmp.eq.s32.totalorder %s12, 0
    %p53 = por %p51, %p52
    %p54 = scmp.ne.s32.totalorder %s46, %s48
    %p55 = scmp.eq.s32.totalorder %s17, 1
    %p56 = por %p54, %p55
    %p57 = scmp.ne.s32.totalorder %s48, %s49
    %p58 = scmp.eq.s32.totalorder %s17, 0
    %p59 = por %p57, %p58
    %p60 = scmp.ne.s32.totalorder %s48, %s49
    %p61 = scmp.eq.s32.totalorder %s18, 1
    %p62 = por %p60, %p61
    %p64 = scmp.ne.s32.totalorder %s49, %s63
    %p65 = scmp.eq.s32.totalorder %s18, 0
    %p66 = por %p64, %p65
    %s68 = sadd.s32 %s67, 1
    %p71 = scmp.eq.s32.totalorder %s12, 1
    %p72 = scmp.ne.s32.totalorder %s67, %s69
    %p73 = scmp.eq.s32.totalorder %s12, 0
    %p74 = por %p72, %p73
    %p75 = scmp.ne.s32.totalorder %s67, %s69
    %p76 = scmp.eq.s32.totalorder %s17, 1
    %p77 = por %p75, %p76
    %p78 = scmp.ne.s32.totalorder %s69, %s70
    %p79 = scmp.eq.s32.totalorder %s17, 0
    %p80 = por %p78, %p79
    %p81 = scmp.ne.s32.totalorder %s69, %s70
    %p82 = scmp.eq.s32.totalorder %s18, 1
    %p83 = por %p81, %p82
    %p85 = scmp.ne.s32.totalorder %s70, %s84
    %p86 = scmp.eq.s32.totalorder %s18, 0
    %p87 = por %p85, %p86
    %s89 = sadd.s32 %s88, 1
    %p92 = scmp.eq.s32.totalorder %s12, 1
    %p93 = scmp.ne.s32.totalorder %s88, %s90
    %p94 = scmp.eq.s32.totalorder %s12, 0
    %p95 = por %p93, %p94
    %p96 = scmp.ne.s32.totalorder %s88, %s90
    %p97 = scmp.eq.s32.totalorder %s17, 1
    %p98 = por %p96, %p97
    %p99 = scmp.ne.s32.totalorder %s90, %s91
    %p100 = scmp.eq.s32.totalorder %s17, 0
    %p101 = por %p99, %p100
    %p102 = scmp.ne.s32.totalorder %s90, %s91
    %p103 = scmp.eq.s32.totalorder %s18, 1
    %p104 = por %p102, %p103
    %p106 = scmp.ne.s32.totalorder %s91, %s105
    %p107 = scmp.eq.s32.totalorder %s18, 0
    %p108 = por %p106, %p107
    %s110 = sadd.s32 %s109, 1
    %p113 = scmp.eq.s32.totalorder %s12, 1
    %p114 = scmp.ne.s32.totalorder %s109, %s111
    %p115 = scmp.eq.s32.totalorder %s12, 0
    %p116 = por %p114, %p115
    %p117 = scmp.ne.s32.totalorder %s109, %s111
    %p118 = scmp.eq.s32.totalorder %s17, 1
    %p119 = por %p117, %p118
    %p120 = scmp.ne.s32.totalorder %s111, %s112
    %p121 = scmp.eq.s32.totalorder %s17, 0
    %p122 = por %p120, %p121
    %p123 = scmp.ne.s32.totalorder %s111, %s112
    %p124 = scmp.eq.s32.totalorder %s18, 1
    %p125 = por %p123, %p124
    %p127 = scmp.ne.s32.totalorder %s112, %s126
    %p128 = scmp.eq.s32.totalorder %s18, 0
    %p129 = por %p127, %p128
    %s131 = sadd.s32 %s130, 1
    %p134 = scmp.eq.s32.totalorder %s12, 1
    %p135 = scmp.ne.s32.totalorder %s130, %s132
    %p136 = scmp.eq.s32.totalorder %s12, 0
    %p137 = por %p135, %p136
    %p138 = scmp.ne.s32.totalorder %s130, %s132
    %p139 = scmp.eq.s32.totalorder %s17, 1
    %p140 = por %p138, %p139
    %p141 = scmp.ne.s32.totalorder %s132, %s133
    %p142 = scmp.eq.s32.totalorder %s17, 0
    %p143 = por %p141, %p142
    %p144 = scmp.ne.s32.totalorder %s132, %s133
    %p145 = scmp.eq.s32.totalorder %s18, 1
    %p146 = por %p144, %p145
    %p148 = scmp.ne.s32.totalorder %s133, %s147
    %p149 = scmp.eq.s32.totalorder %s18, 0
    %p150 = por %p148, %p149
    %s151 = ssub.s32 %s12, %s19
    %p152 = scmp.eq.s32.totalorder %s151, 0
    %s154 = sadd.s32 %s153, 1
    %s155 = scalar_select %p152, %s153, %s154
    %p158 = pneg %p152
    %p159 = scmp.eq.s32.totalorder %s12, 1
    %p160 = por %p158, %p159
    %p161 = scmp.ne.s32.totalorder %s153, %s156
    %p162 = scmp.eq.s32.totalorder %s12, 0
    %p163 = por %p161, %p162
    %p164 = scmp.ne.s32.totalorder %s153, %s156
    %p165 = scmp.eq.s32.totalorder %s17, 1
    %p166 = por %p164, %p165
    %p167 = scmp.ne.s32.totalorder %s156, %s157
    %p168 = scmp.eq.s32.totalorder %s17, 0
    %p169 = por %p167, %p168
    %p170 = scmp.ne.s32.totalorder %s156, %s157
    %p171 = scmp.eq.s32.totalorder %s18, 1
    %p172 = por %p170, %p171
    %p174 = scmp.ne.s32.totalorder %s157, %s173
    %p175 = scmp.eq.s32.totalorder %s18, 0
    %p176 = por %p174, %p175
    %p177 = scmp.le.s32.totalorder 1, %s12
    %p178 = scmp.lt.s32.totalorder %s12, 3
    %p179 = pnand %p177, %p178
    %p180 = pneg %p179
    // Predicated region
    $region9: #{tpu_custom_call.1} parent=5 // pred_check
      _
    $region10: #{tpu_custom_call.1} parent=5 // pred_check_branch
      %182 = sbr.rel (%p179) target = $region12
    $region11: #{tpu_custom_call.1} parent=5 // pred_region
      %s183 = ssub.s32 %s12, 1
      // Predicated region
      $region13: #{tpu_custom_call.1} parent=11 // pred_check
        %p184 = pneg %p59
      $region14: #{tpu_custom_call.1} parent=11 // pred_check_branch
        %186 = sbr.rel (%p184) target = $region16
      $region15: #{tpu_custom_call.1} parent=11 // pred_region
        _
      $region16: #{tpu_custom_call.1} parent=11 // pred_fallthru
        _
      // Predicated region
      $region17: #{tpu_custom_call.1} parent=11 // pred_check
        %p187 = pneg %p80
      $region18: #{tpu_custom_call.1} parent=11 // pred_check_branch
        %189 = sbr.rel (%p187) target = $region20
      $region19: #{tpu_custom_call.1} parent=11 // pred_region
        _
      $region20: #{tpu_custom_call.1} parent=11 // pred_fallthru
        _
      // Predicated region
      $region21: #{tpu_custom_call.1} parent=11 // pred_check
        %p190 = pneg %p101
      $region22: #{tpu_custom_call.1} parent=11 // pred_check_branch
        %192 = sbr.rel (%p190) target = $region24
      $region23: #{tpu_custom_call.1} parent=11 // pred_region
        _
      $region24: #{tpu_custom_call.1} parent=11 // pred_fallthru
        _
      // Predicated region
      $region25: #{tpu_custom_call.1} parent=11 // pred_check
        %p193 = pneg %p122
      $region26: #{tpu_custom_call.1} parent=11 // pred_check_branch
        %195 = sbr.rel (%p193) target = $region28
      $region27: #{tpu_custom_call.1} parent=11 // pred_region
        _
      $region28: #{tpu_custom_call.1} parent=11 // pred_fallthru
        _
      // Predicated region
      $region29: #{tpu_custom_call.1} parent=11 // pred_check
        %p196 = pneg %p143
      $region30: #{tpu_custom_call.1} parent=11 // pred_check_branch
        %198 = sbr.rel (%p196) target = $region32
      $region31: #{tpu_custom_call.1} parent=11 // pred_region
        _
      $region32: #{tpu_custom_call.1} parent=11 // pred_fallthru
        _
    $region12: #{tpu_custom_call.1} parent=5 // pred_fallthru
      _
    %p199 = scmp.lt.s32.totalorder %s12, 2
    // Predicated region
    $region33: #{tpu_custom_call.1} parent=5 // pred_check
      %p200 = pneg %p199
    $region34: #{tpu_custom_call.1} parent=5 // pred_check_branch
      %202 = sbr.rel (%p200) target = $region36
    $region35: #{tpu_custom_call.1} parent=5 // pred_region
      // Predicated region
      $region37: #{tpu_custom_call.1} parent=35 // pred_check
        %p203 = pneg %p32
      $region38: #{tpu_custom_call.1} parent=35 // pred_check_branch
        %205 = sbr.rel (%p203) target = $region40
      $region39: #{tpu_custom_call.1} parent=35 // pred_region
        %p206 = scmp.lt.s32.totalorder %s12, 1
        %s207 = scalar_select %p206, %s12, 1
        %s208 = smul.addr %s207, 32
        %s209 = smul.addr %s208, 8
        %s210 = scalar_lea.vmem %s0, %s209
      $region40: #{tpu_custom_call.1} parent=35 // pred_fallthru
        _
    $region36: #{tpu_custom_call.1} parent=5 // pred_fallthru
      _
    %p211 = scmp.le.s32.totalorder 1, %s12
    %p212 = scmp.lt.s32.totalorder %s12, 3
    %p213 = pnand %p211, %p212
    %p214 = pneg %p213
    // Predicated region
    $region41: #{tpu_custom_call.1} parent=5 // pred_check
      _
    $region42: #{tpu_custom_call.1} parent=5 // pred_check_branch
      %216 = sbr.rel (%p213) target = $region44
    $region43: #{tpu_custom_call.1} parent=5 // pred_region
      %s217 = ssub.s32 %s12, 1
      %p218 = scmp.lt.s32.totalorder %s17, 1
      %s219 = scalar_select %p218, %s17, 1
      %s220 = smul.addr %s219, 32
      %s221 = smul.addr %s220, 8
      %s222 = scalar_lea.vmem %s0, %s221
      %p223 = pneg %p38
      %p224 = pneg %p35
      %p225 = pneg %p59
      %p226 = pneg %p56
      %p227 = pneg %p80
      %p228 = pneg %p77
      %p229 = pneg %p101
      %p230 = pneg %p98
      %p231 = pneg %p122
      %p232 = pneg %p119
      %p233 = pneg %p143
      %p234 = pneg %p140
      %p235 = pneg %p169
      %p236 = pneg %p166
      %p237 = scmp.lt.s32.totalorder %s17, 1
      %s238 = scalar_select %p237, %s17, 1
      %s239 = smul.addr %s238, 32
      %s240 = smul.addr %s239, 8
      %s241 = scalar_lea.vmem %s6, %s240
      %p242 = scmp.lt.s32.totalorder %s17, 1
      %s243 = scalar_select %p242, %s17, 1
      %s244 = smul.addr %s243, 32
      %s245 = smul.addr %s244, 8
      %s246 = scalar_lea.vmem %s0, %s245
      %p247 = scmp.lt.s32.totalorder %s17, 1
      %s248 = scalar_select %p247, %s17, 1
      %s249 = smul.addr %s248, 32
      %s250 = smul.addr %s249, 8
      %s251 = scalar_lea.vmem %s6, %s250
      %v252 = vld [vmem:[%s246] sm:$0xff]
      %v253 = vld [vmem:[%s246 + $0x8] sm:$0xff]
      %v254 = vld [vmem:[%s246 + $0x10] sm:$0xff]
      %v255 = vld [vmem:[%s246 + $0x18] sm:$0xff]
      %v256 = vld [vmem:[%s246 + $0x20] sm:$0xff]
      %v257 = vld [vmem:[%s246 + $0x28] sm:$0xff]
      %v258 = vld [vmem:[%s246 + $0x30] sm:$0xff]
      %v259 = vld [vmem:[%s246 + $0x38] sm:$0xff]
      %v260 = vld [vmem:[%s246 + $0x40] sm:$0xff]
      %v261 = vld [vmem:[%s246 + $0x48] sm:$0xff]
      %v262 = vld [vmem:[%s246 + $0x50] sm:$0xff]
      %v263 = vld [vmem:[%s246 + $0x58] sm:$0xff]
      %v264 = vld [vmem:[%s246 + $0x60] sm:$0xff]
      %v265 = vld [vmem:[%s246 + $0x68] sm:$0xff]
      %v266 = vld [vmem:[%s246 + $0x70] sm:$0xff]
      %v267 = vld [vmem:[%s246 + $0x78] sm:$0xff]
      %v268 = vld [vmem:[%s246 + $0x80] sm:$0xff]
      %v269 = vld [vmem:[%s246 + $0x88] sm:$0xff]
      %v270 = vld [vmem:[%s246 + $0x90] sm:$0xff]
      %v271 = vld [vmem:[%s246 + $0x98] sm:$0xff]
      %v272 = vld [vmem:[%s246 + $0xa0] sm:$0xff]
      %v273 = vld [vmem:[%s246 + $0xa8] sm:$0xff]
      %v274 = vld [vmem:[%s246 + $0xb0] sm:$0xff]
      %v275 = vld [vmem:[%s246 + $0xb8] sm:$0xff]
      %v276 = vld [vmem:[%s246 + $0xc0] sm:$0xff]
      %v277 = vld [vmem:[%s246 + $0xc8] sm:$0xff]
      %v278 = vld [vmem:[%s246 + $0xd0] sm:$0xff]
      %v279 = vld [vmem:[%s246 + $0xd8] sm:$0xff]
      %v280 = vld [vmem:[%s246 + $0xe0] sm:$0xff]
      %v281 = vld [vmem:[%s246 + $0xe8] sm:$0xff]
      %v282 = vld [vmem:[%s246 + $0xf0] sm:$0xff]
      %v283 = vld [vmem:[%s246 + $0xf8] sm:$0xff]
      %v284 = vld [vmem:[%s1] sm:$0xff]
      %v285 = vld [vmem:[%s1 + $0x8] sm:$0xff]
      %v286 = vld [vmem:[%s1 + $0x10] sm:$0xff]
      %v287 = vld [vmem:[%s1 + $0x18] sm:$0xff]
      %v288 = vld [vmem:[%s1 + $0x20] sm:$0xff]
      %v289 = vld [vmem:[%s1 + $0x28] sm:$0xff]
      %v290 = vld [vmem:[%s1 + $0x30] sm:$0xff]
      %v291 = vld [vmem:[%s1 + $0x38] sm:$0xff]
      %v292 = vld [vmem:[%s1 + $0x40] sm:$0xff]
      %v293 = vld [vmem:[%s1 + $0x48] sm:$0xff]
      %v294 = vld [vmem:[%s1 + $0x50] sm:$0xff]
      %v295 = vld [vmem:[%s1 + $0x58] sm:$0xff]
      %v296 = vld [vmem:[%s1 + $0x60] sm:$0xff]
      %v297 = vld [vmem:[%s1 + $0x68] sm:$0xff]
      %v298 = vld [vmem:[%s1 + $0x70] sm:$0xff]
      %v299 = vld [vmem:[%s1 + $0x78] sm:$0xff]
      %300 = vmatpush.msra.mxu0 %v267
      %301 = vmatpush.msra.mxu0 %v266
      %302 = vmatpush.msra.mxu0 %v265
      %303 = vmatpush.msra.mxu0 %v264
      %304 = vmatpush.msra.mxu0 %v263
      %305 = vmatpush.msra.mxu0 %v262
      %306 = vmatpush.msra.mxu0 %v261
      %307 = vmatpush.msra.mxu0 %v260
      %308 = vmatpush.msra.mxu0 %v259
      %309 = vmatpush.msra.mxu0 %v258
      %310 = vmatpush.msra.mxu0 %v257
      %311 = vmatpush.msra.mxu0 %v256
      %312 = vmatpush.msra.mxu0 %v255
      %313 = vmatpush.msra.mxu0 %v254
      %314 = vmatpush.msra.mxu0 %v253
      %315 = vmatpush.msra.mxu0 %v252
      %316 = vmatmul.f32.gmra.mxu0 %v284
      %v317 = vpop.f32.mrf.mxu0
      %v318 = vadd.f32 0.0, %v317
      %319 = vmatmul.f32.gmra.mxu0 %v286
      %v320 = vpop.f32.mrf.mxu0
      %v321 = vadd.f32 0.0, %v320
      %322 = vmatmul.f32.gmra.mxu0 %v288
      %v323 = vpop.f32.mrf.mxu0
      %v324 = vadd.f32 0.0, %v323
      %325 = vmatmul.f32.gmra.mxu0 %v290
      %v326 = vpop.f32.mrf.mxu0
      %v327 = vadd.f32 0.0, %v326
      %328 = vmatmul.f32.gmra.mxu0 %v292
      %v329 = vpop.f32.mrf.mxu0
      %v330 = vadd.f32 0.0, %v329
      %331 = vmatmul.f32.gmra.mxu0 %v294
      %v332 = vpop.f32.mrf.mxu0
      %v333 = vadd.f32 0.0, %v332
      %334 = vmatmul.f32.gmra.mxu0 %v296
      %v335 = vpop.f32.mrf.mxu0
      %v336 = vadd.f32 0.0, %v335
      %337 = vmatmul.f32.gmra.mxu0 %v298
      %v338 = vpop.f32.mrf.mxu0
      %v339 = vadd.f32 0.0, %v338
      %340 = vdwg.mxu0
      %341 = vmatpush.msra.mxu0 %v283
      %342 = vmatpush.msra.mxu0 %v282
      %343 = vmatpush.msra.mxu0 %v281
      %344 = vmatpush.msra.mxu0 %v280
      %345 = vmatpush.msra.mxu0 %v279
      %346 = vmatpush.msra.mxu0 %v278
      %347 = vmatpush.msra.mxu0 %v277
      %348 = vmatpush.msra.mxu0 %v276
      %349 = vmatpush.msra.mxu0 %v275
      %350 = vmatpush.msra.mxu0 %v274
      %351 = vmatpush.msra.mxu0 %v273
      %352 = vmatpush.msra.mxu0 %v272
      %353 = vmatpush.msra.mxu0 %v271
      %354 = vmatpush.msra.mxu0 %v270
      %355 = vmatpush.msra.mxu0 %v269
      %356 = vmatpush.msra.mxu0 %v268
      %357 = vmatmul.f32.gmra.mxu0 %v285
      %v358 = vpop.f32.mrf.mxu0
      %v359 = vadd.f32 %v318, %v358
      %360 = vmatmul.f32.gmra.mxu0 %v287
      %v361 = vpop.f32.mrf.mxu0
      %v362 = vadd.f32 %v321, %v361
      %363 = vmatmul.f32.gmra.mxu0 %v289
      %v364 = vpop.f32.mrf.mxu0
      %v365 = vadd.f32 %v324, %v364
      %366 = vmatmul.f32.gmra.mxu0 %v291
      %v367 = vpop.f32.mrf.mxu0
      %v368 = vadd.f32 %v327, %v367
      %369 = vmatmul.f32.gmra.mxu0 %v293
      %v370 = vpop.f32.mrf.mxu0
      %v371 = vadd.f32 %v330, %v370
      %372 = vmatmul.f32.gmra.mxu0 %v295
      %v373 = vpop.f32.mrf.mxu0
      %v374 = vadd.f32 %v333, %v373
      %375 = vmatmul.f32.gmra.mxu0 %v297
      %v376 = vpop.f32.mrf.mxu0
      %v377 = vadd.f32 %v336, %v376
      %378 = vmatmul.f32.gmra.mxu0 %v299
      %v379 = vpop.f32.mrf.mxu0
      %v380 = vadd.f32 %v339, %v379
      %381 = vdwg.mxu0
      %v382 = vld [vmem:[%s3] sm:$0x1]
      %v384 = vperm.slane %v382, 0
      %v386 = vmul.f32 %v359, %v384
      %v387 = vmul.f32 %v362, %v384
      %v388 = vmul.f32 %v365, %v384
      %v389 = vmul.f32 %v368, %v384
      %v390 = vmul.f32 %v371, %v384
      %v391 = vmul.f32 %v374, %v384
      %v392 = vmul.f32 %v377, %v384
      %v393 = vmul.f32 %v380, %v384
      %v394 = vld [vmem:[%s4] sm:$0x1]
      %v396 = vperm.slane %v394, 0
      %v398 = vadd.f32 %v386, %v396
      %v399 = vadd.f32 %v387, %v396
      %v400 = vadd.f32 %v388, %v396
      %v401 = vadd.f32 %v389, %v396
      %v402 = vadd.f32 %v390, %v396
      %v403 = vadd.f32 %v391, %v396
      %v404 = vadd.f32 %v392, %v396
      %v405 = vadd.f32 %v393, %v396
      %v406 = vmax.f32 %v398, 0.0
      %v407 = vmax.f32 %v399, 0.0
      %v408 = vmax.f32 %v400, 0.0
      %v409 = vmax.f32 %v401, 0.0
      %v410 = vmax.f32 %v402, 0.0
      %v411 = vmax.f32 %v403, 0.0
      %v412 = vmax.f32 %v404, 0.0
      %v413 = vmax.f32 %v405, 0.0
      %v414 = vld [vmem:[%s5] sm:$0xf]
      %vm415 = vcmask 31744
      %v417 = vsel %vm415, %v406, 0
      %v420 = vsel %vm415, %v407, 0
      %v423 = vsel %vm415, %v408, 0
      %v426 = vsel %vm415, %v409, 0
      %v429 = vsel %vm415, %v410, 0
      %v432 = vsel %vm415, %v411, 0
      %v435 = vsel %vm415, %v412, 0
      %v438 = vsel %vm415, %v413, 0
      %vm440 = vcmask 1043456
      %v442 = vsel %vm440, %v414, 0
      %444 = vmatpush.msra.mxu0 0.0
      %445 = vmatpush.msra.mxu0 0.0
      %446 = vmatpush.msra.mxu0 0.0
      %447 = vmatpush.msra.mxu0 0.0
      %448 = vmatpush.msra.mxu0 0.0
      %449 = vmatpush.msra.mxu0 0.0
      %450 = vmatpush.msra.mxu0 0.0
      %451 = vmatpush.msra.mxu0 0.0
      %452 = vmatpush.msra.mxu0 0.0
      %453 = vmatpush.msra.mxu0 0.0
      %454 = vmatpush.msra.mxu0 0.0
      %455 = vmatpush.msra.mxu0 0.0
      %456 = vmatpush.msra.mxu0 0.0
      %457 = vmatpush.msra.mxu0 0.0
      %458 = vmatpush.msra.mxu0 0.0
      %459 = vmatpush.msra.mxu0 %v442
      %460 = vmatmul.f32.gmra.mxu0 %v417
      %v461 = vpop.f32.mrf.mxu0
      %v462 = vadd.f32 0.0, %v461
      %463 = vmatmul.f32.gmra.mxu0 %v420
      %v464 = vpop.f32.mrf.mxu0
      %v465 = vadd.f32 0.0, %v464
      %466 = vmatmul.f32.gmra.mxu0 %v423
      %v467 = vpop.f32.mrf.mxu0
      %v468 = vadd.f32 0.0, %v467
      %469 = vmatmul.f32.gmra.mxu0 %v426
      %v470 = vpop.f32.mrf.mxu0
      %v471 = vadd.f32 0.0, %v470
      %472 = vmatmul.f32.gmra.mxu0 %v429
      %v473 = vpop.f32.mrf.mxu0
      %v474 = vadd.f32 0.0, %v473
      %475 = vmatmul.f32.gmra.mxu0 %v432
      %v476 = vpop.f32.mrf.mxu0
      %v477 = vadd.f32 0.0, %v476
      %478 = vmatmul.f32.gmra.mxu0 %v435
      %v479 = vpop.f32.mrf.mxu0
      %v480 = vadd.f32 0.0, %v479
      %481 = vmatmul.f32.gmra.mxu0 %v438
      %v482 = vpop.f32.mrf.mxu0
      %v483 = vadd.f32 0.0, %v482
      %484 = vdwg.mxu0
      %v485 = vld [vmem:[%s2] sm:$0xff]
      %v486 = vld [vmem:[%s2 + $0x8] sm:$0xff]
      %v487 = vld [vmem:[%s2 + $0x10] sm:$0xff]
      %v488 = vld [vmem:[%s2 + $0x18] sm:$0xff]
      %v489 = vld [vmem:[%s2 + $0x20] sm:$0xff]
      %v490 = vld [vmem:[%s2 + $0x28] sm:$0xff]
      %v491 = vld [vmem:[%s2 + $0x30] sm:$0xff]
      %v492 = vld [vmem:[%s2 + $0x38] sm:$0xff]
      %v493 = vld [vmem:[%s2 + $0x40] sm:$0xff]
      %v494 = vld [vmem:[%s2 + $0x48] sm:$0xff]
      %v495 = vld [vmem:[%s2 + $0x50] sm:$0xff]
      %v496 = vld [vmem:[%s2 + $0x58] sm:$0xff]
      %v497 = vld [vmem:[%s2 + $0x60] sm:$0xff]
      %v498 = vld [vmem:[%s2 + $0x68] sm:$0xff]
      %v499 = vld [vmem:[%s2 + $0x70] sm:$0xff]
      %v500 = vld [vmem:[%s2 + $0x78] sm:$0xff]
      %v501 = vld [vmem:[%s2 + $0x80] sm:$0xff]
      %v502 = vld [vmem:[%s2 + $0x88] sm:$0xff]
      %v503 = vld [vmem:[%s2 + $0x90] sm:$0xff]
      %v504 = vld [vmem:[%s2 + $0x98] sm:$0xff]
      %v505 = vld [vmem:[%s2 + $0xa0] sm:$0xff]
      %v506 = vld [vmem:[%s2 + $0xa8] sm:$0xff]
      %v507 = vld [vmem:[%s2 + $0xb0] sm:$0xff]
      %v508 = vld [vmem:[%s2 + $0xb8] sm:$0xff]
      %v509 = vld [vmem:[%s2 + $0xc0] sm:$0xff]
      %v510 = vld [vmem:[%s2 + $0xc8] sm:$0xff]
      %v511 = vld [vmem:[%s2 + $0xd0] sm:$0xff]
      %v512 = vld [vmem:[%s2 + $0xd8] sm:$0xff]
      %v513 = vld [vmem:[%s2 + $0xe0] sm:$0xff]
      %v514 = vld [vmem:[%s2 + $0xe8] sm:$0xff]
      %v515 = vld [vmem:[%s2 + $0xf0] sm:$0xff]
      %v516 = vld [vmem:[%s2 + $0xf8] sm:$0xff]
      %vm517 = vcmask 523264
      %v519 = vsel %vm517, %v485, 0
      %v522 = vsel %vm517, %v486, 0
      %v525 = vsel %vm517, %v487, 0
      %v528 = vsel %vm517, %v488, 0
      %v531 = vsel %vm517, %v489, 0
      %v534 = vsel %vm517, %v490, 0
      %v537 = vsel %vm517, %v491, 0
      %v540 = vsel %vm517, %v492, 0
      %v543 = vsel %vm517, %v493, 0
      %v546 = vsel %vm517, %v494, 0
      %v549 = vsel %vm517, %v495, 0
      %v552 = vsel %vm517, %v496, 0
      %v555 = vsel %vm517, %v497, 0
      %v558 = vsel %vm517, %v498, 0
      %v561 = vsel %vm517, %v499, 0
      %v564 = vsel %vm517, %v500, 0
      %v567 = vsel %vm517, %v501, 0
      %v570 = vsel %vm517, %v502, 0
      %v573 = vsel %vm517, %v503, 0
      %v576 = vsel %vm517, %v504, 0
      %v579 = vsel %vm517, %v505, 0
      %v582 = vsel %vm517, %v506, 0
      %v585 = vsel %vm517, %v507, 0
      %v588 = vsel %vm517, %v508, 0
      %v591 = vsel %vm517, %v509, 0
      %v594 = vsel %vm517, %v510, 0
      %v597 = vsel %vm517, %v511, 0
      %v600 = vsel %vm517, %v512, 0
      %v603 = vsel %vm517, %v513, 0
      %v606 = vsel %vm517, %v514, 0
      %v609 = vsel %vm517, %v515, 0
      %v612 = vsel %vm517, %v516, 0
      %614 = vmatpush.msra.mxu0 0.0
      %615 = vmatpush.msra.mxu0 0.0
      %616 = vmatpush.msra.mxu0 0.0
      %617 = vmatpush.msra.mxu0 0.0
      %618 = vmatpush.msra.mxu0 0.0
      %619 = vmatpush.msra.mxu0 0.0
      %620 = vmatpush.msra.mxu0 0.0
      %621 = vmatpush.msra.mxu0 0.0
      %622 = vmatpush.msra.mxu0 %v483
      %623 = vmatpush.msra.mxu0 %v480
      %624 = vmatpush.msra.mxu0 %v477
      %625 = vmatpush.msra.mxu0 %v474
      %626 = vmatpush.msra.mxu0 %v471
      %627 = vmatpush.msra.mxu0 %v468
      %628 = vmatpush.msra.mxu0 %v465
      %629 = vmatpush.msra.mxu0 %v462
      %630 = vmatmul.f32.gmra.mxu0 %v519
      %v631 = vpop.f32.mrf.mxu0
      %v632 = vadd.f32 0.0, %v631
      %633 = vmatmul.f32.gmra.mxu0 %v522
      %v634 = vpop.f32.mrf.mxu0
      %v635 = vadd.f32 0.0, %v634
      %636 = vmatmul.f32.gmra.mxu0 %v525
      %v637 = vpop.f32.mrf.mxu0
      %v638 = vadd.f32 0.0, %v637
      %639 = vmatmul.f32.gmra.mxu0 %v528
      %v640 = vpop.f32.mrf.mxu0
      %v641 = vadd.f32 0.0, %v640
      %642 = vmatmul.f32.gmra.mxu0 %v531
      %v643 = vpop.f32.mrf.mxu0
      %v644 = vadd.f32 0.0, %v643
      %645 = vmatmul.f32.gmra.mxu0 %v534
      %v646 = vpop.f32.mrf.mxu0
      %v647 = vadd.f32 0.0, %v646
      %648 = vmatmul.f32.gmra.mxu0 %v537
      %v649 = vpop.f32.mrf.mxu0
      %v650 = vadd.f32 0.0, %v649
      %651 = vmatmul.f32.gmra.mxu0 %v540
      %v652 = vpop.f32.mrf.mxu0
      %v653 = vadd.f32 0.0, %v652
      %654 = vmatmul.f32.gmra.mxu0 %v543
      %v655 = vpop.f32.mrf.mxu0
      %v656 = vadd.f32 0.0, %v655
      %657 = vmatmul.f32.gmra.mxu0 %v546
      %v658 = vpop.f32.mrf.mxu0
      %v659 = vadd.f32 0.0, %v658
      %660 = vmatmul.f32.gmra.mxu0 %v549
      %v661 = vpop.f32.mrf.mxu0
      %v662 = vadd.f32 0.0, %v661
      %663 = vmatmul.f32.gmra.mxu0 %v552
      %v664 = vpop.f32.mrf.mxu0
      %v665 = vadd.f32 0.0, %v664
      %666 = vmatmul.f32.gmra.mxu0 %v555
      %v667 = vpop.f32.mrf.mxu0
      %v668 = vadd.f32 0.0, %v667
      %669 = vmatmul.f32.gmra.mxu0 %v558
      %v670 = vpop.f32.mrf.mxu0
      %v671 = vadd.f32 0.0, %v670
      %672 = vmatmul.f32.gmra.mxu0 %v561
      %v673 = vpop.f32.mrf.mxu0
      %v674 = vadd.f32 0.0, %v673
      %675 = vmatmul.f32.gmra.mxu0 %v564
      %v676 = vpop.f32.mrf.mxu0
      %v677 = vadd.f32 0.0, %v676
      %678 = vmatmul.f32.gmra.mxu0 %v567
      %v679 = vpop.f32.mrf.mxu0
      %v680 = vadd.f32 0.0, %v679
      %681 = vmatmul.f32.gmra.mxu0 %v570
      %v682 = vpop.f32.mrf.mxu0
      %v683 = vadd.f32 0.0, %v682
      %684 = vmatmul.f32.gmra.mxu0 %v573
      %v685 = vpop.f32.mrf.mxu0
      %v686 = vadd.f32 0.0, %v685
      %687 = vmatmul.f32.gmra.mxu0 %v576
      %v688 = vpop.f32.mrf.mxu0
      %v689 = vadd.f32 0.0, %v688
      %690 = vmatmul.f32.gmra.mxu0 %v579
      %v691 = vpop.f32.mrf.mxu0
      %v692 = vadd.f32 0.0, %v691
      %693 = vmatmul.f32.gmra.mxu0 %v582
      %v694 = vpop.f32.mrf.mxu0
      %v695 = vadd.f32 0.0, %v694
      %696 = vmatmul.f32.gmra.mxu0 %v585
      %v697 = vpop.f32.mrf.mxu0
      %v698 = vadd.f32 0.0, %v697
      %699 = vmatmul.f32.gmra.mxu0 %v588
      %v700 = vpop.f32.mrf.mxu0
      %v701 = vadd.f32 0.0, %v700
      %702 = vmatmul.f32.gmra.mxu0 %v591
      %v703 = vpop.f32.mrf.mxu0
      %v704 = vadd.f32 0.0, %v703
      %705 = vmatmul.f32.gmra.mxu0 %v594
      %v706 = vpop.f32.mrf.mxu0
      %v707 = vadd.f32 0.0, %v706
      %708 = vmatmul.f32.gmra.mxu0 %v597
      %v709 = vpop.f32.mrf.mxu0
      %v710 = vadd.f32 0.0, %v709
      %711 = vmatmul.f32.gmra.mxu0 %v600
      %v712 = vpop.f32.mrf.mxu0
      %v713 = vadd.f32 0.0, %v712
      %714 = vmatmul.f32.gmra.mxu0 %v603
      %v715 = vpop.f32.mrf.mxu0
      %v716 = vadd.f32 0.0, %v715
      %717 = vmatmul.f32.gmra.mxu0 %v606
      %v718 = vpop.f32.mrf.mxu0
      %v719 = vadd.f32 0.0, %v718
      %720 = vmatmul.f32.gmra.mxu0 %v609
      %v721 = vpop.f32.mrf.mxu0
      %v722 = vadd.f32 0.0, %v721
      %723 = vmatmul.f32.gmra.mxu0 %v612
      %v724 = vpop.f32.mrf.mxu0
      %v725 = vadd.f32 0.0, %v724
      %726 = vdwg.mxu0
      %s727 = scalar_lea.vmem %s1, 128
      %v728 = vld [vmem:[%s727] sm:$0xff]
      %v729 = vld [vmem:[%s727 + $0x8] sm:$0xff]
      %v730 = vld [vmem:[%s727 + $0x10] sm:$0xff]
      %v731 = vld [vmem:[%s727 + $0x18] sm:$0xff]
      %v732 = vld [vmem:[%s727 + $0x20] sm:$0xff]
      %v733 = vld [vmem:[%s727 + $0x28] sm:$0xff]
      %v734 = vld [vmem:[%s727 + $0x30] sm:$0xff]
      %v735 = vld [vmem:[%s727 + $0x38] sm:$0xff]
      %v736 = vld [vmem:[%s727 + $0x40] sm:$0xff]
      %v737 = vld [vmem:[%s727 + $0x48] sm:$0xff]
      %v738 = vld [vmem:[%s727 + $0x50] sm:$0xff]
      %v739 = vld [vmem:[%s727 + $0x58] sm:$0xff]
      %v740 = vld [vmem:[%s727 + $0x60] sm:$0xff]
      %v741 = vld [vmem:[%s727 + $0x68] sm:$0xff]
      %v742 = vld [vmem:[%s727 + $0x70] sm:$0xff]
      %v743 = vld [vmem:[%s727 + $0x78] sm:$0xff]
      %744 = vmatpush.msra.mxu0 %v267
      %745 = vmatpush.msra.mxu0 %v266
      %746 = vmatpush.msra.mxu0 %v265
      %747 = vmatpush.msra.mxu0 %v264
      %748 = vmatpush.msra.mxu0 %v263
      %749 = vmatpush.msra.mxu0 %v262
      %750 = vmatpush.msra.mxu0 %v261
      %751 = vmatpush.msra.mxu0 %v260
      %752 = vmatpush.msra.mxu0 %v259
      %753 = vmatpush.msra.mxu0 %v258
      %754 = vmatpush.msra.mxu0 %v257
      %755 = vmatpush.msra.mxu0 %v256
      %756 = vmatpush.msra.mxu0 %v255
      %757 = vmatpush.msra.mxu0 %v254
      %758 = vmatpush.msra.mxu0 %v253
      %759 = vmatpush.msra.mxu0 %v252
      %760 = vmatmul.f32.gmra.mxu0 %v728
      %v761 = vpop.f32.mrf.mxu0
      %v762 = vadd.f32 0.0, %v761
      %763 = vmatmul.f32.gmra.mxu0 %v730
      %v764 = vpop.f32.mrf.mxu0
      %v765 = vadd.f32 0.0, %v764
      %766 = vmatmul.f32.gmra.mxu0 %v732
      %v767 = vpop.f32.mrf.mxu0
      %v768 = vadd.f32 0.0, %v767
      %769 = vmatmul.f32.gmra.mxu0 %v734
      %v770 = vpop.f32.mrf.mxu0
      %v771 = vadd.f32 0.0, %v770
      %772 = vmatmul.f32.gmra.mxu0 %v736
      %v773 = vpop.f32.mrf.mxu0
      %v774 = vadd.f32 0.0, %v773
      %775 = vmatmul.f32.gmra.mxu0 %v738
      %v776 = vpop.f32.mrf.mxu0
      %v777 = vadd.f32 0.0, %v776
      %778 = vmatmul.f32.gmra.mxu0 %v740
      %v779 = vpop.f32.mrf.mxu0
      %v780 = vadd.f32 0.0, %v779
      %781 = vmatmul.f32.gmra.mxu0 %v742
      %v782 = vpop.f32.mrf.mxu0
      %v783 = vadd.f32 0.0, %v782
      %784 = vdwg.mxu0
      %785 = vmatpush.msra.mxu0 %v283
      %786 = vmatpush.msra.mxu0 %v282
      %787 = vmatpush.msra.mxu0 %v281
      %788 = vmatpush.msra.mxu0 %v280
      %789 = vmatpush.msra.mxu0 %v279
      %790 = vmatpush.msra.mxu0 %v278
      %791 = vmatpush.msra.mxu0 %v277
      %792 = vmatpush.msra.mxu0 %v276
      %793 = vmatpush.msra.mxu0 %v275
      %794 = vmatpush.msra.mxu0 %v274
      %795 = vmatpush.msra.mxu0 %v273
      %796 = vmatpush.msra.mxu0 %v272
      %797 = vmatpush.msra.mxu0 %v271
      %798 = vmatpush.msra.mxu0 %v270
      %799 = vmatpush.msra.mxu0 %v269
      %800 = vmatpush.msra.mxu0 %v268
      %801 = vmatmul.f32.gmra.mxu0 %v729
      %v802 = vpop.f32.mrf.mxu0
      %v803 = vadd.f32 %v762, %v802
      %804 = vmatmul.f32.gmra.mxu0 %v731
      %v805 = vpop.f32.mrf.mxu0
      %v806 = vadd.f32 %v765, %v805
      %807 = vmatmul.f32.gmra.mxu0 %v733
      %v808 = vpop.f32.mrf.mxu0
      %v809 = vadd.f32 %v768, %v808
      %810 = vmatmul.f32.gmra.mxu0 %v735
      %v811 = vpop.f32.mrf.mxu0
      %v812 = vadd.f32 %v771, %v811
      %813 = vmatmul.f32.gmra.mxu0 %v737
      %v814 = vpop.f32.mrf.mxu0
      %v815 = vadd.f32 %v774, %v814
      %816 = vmatmul.f32.gmra.mxu0 %v739
      %v817 = vpop.f32.mrf.mxu0
      %v818 = vadd.f32 %v777, %v817
      %819 = vmatmul.f32.gmra.mxu0 %v741
      %v820 = vpop.f32.mrf.mxu0
      %v821 = vadd.f32 %v780, %v820
      %822 = vmatmul.f32.gmra.mxu0 %v743
      %v823 = vpop.f32.mrf.mxu0
      %v824 = vadd.f32 %v783, %v823
      %825 = vdwg.mxu0
      %s826 = scalar_lea.vmem %s3, 1
      %v827 = vld [vmem:[%s826] sm:$0x1]
      %v829 = vperm.slane %v827, 0
      %v831 = vmul.f32 %v803, %v829
      %v832 = vmul.f32 %v806, %v829
      %v833 = vmul.f32 %v809, %v829
      %v834 = vmul.f32 %v812, %v829
      %v835 = vmul.f32 %v815, %v829
      %v836 = vmul.f32 %v818, %v829
      %v837 = vmul.f32 %v821, %v829
      %v838 = vmul.f32 %v824, %v829
      %s839 = scalar_lea.vmem %s4, 1
      %v840 = vld [vmem:[%s839] sm:$0x1]
      %v842 = vperm.slane %v840, 0
      %v844 = vadd.f32 %v831, %v842
      %v845 = vadd.f32 %v832, %v842
      %v846 = vadd.f32 %v833, %v842
      %v847 = vadd.f32 %v834, %v842
      %v848 = vadd.f32 %v835, %v842
      %v849 = vadd.f32 %v836, %v842
      %v850 = vadd.f32 %v837, %v842
      %v851 = vadd.f32 %v838, %v842
      %v852 = vmax.f32 %v844, 0.0
      %v853 = vmax.f32 %v845, 0.0
      %v854 = vmax.f32 %v846, 0.0
      %v855 = vmax.f32 %v847, 0.0
      %v856 = vmax.f32 %v848, 0.0
      %v857 = vmax.f32 %v849, 0.0
      %v858 = vmax.f32 %v850, 0.0
      %v859 = vmax.f32 %v851, 0.0
      %s860 = scalar_lea.vmem %s5, 4
      %v861 = vld [vmem:[%s860] sm:$0xf]
      %v863 = vsel %vm415, %v852, 0
      %v866 = vsel %vm415, %v853, 0
      %v869 = vsel %vm415, %v854, 0
      %v872 = vsel %vm415, %v855, 0
      %v875 = vsel %vm415, %v856, 0
      %v878 = vsel %vm415, %v857, 0
      %v881 = vsel %vm415, %v858, 0
      %v884 = vsel %vm415, %v859, 0
      %v887 = vsel %vm440, %v861, 0
      %889 = vmatpush.msra.mxu0 0.0
      %890 = vmatpush.msra.mxu0 0.0
      %891 = vmatpush.msra.mxu0 0.0
      %892 = vmatpush.msra.mxu0 0.0
      %893 = vmatpush.msra.mxu0 0.0
      %894 = vmatpush.msra.mxu0 0.0
      %895 = vmatpush.msra.mxu0 0.0
      %896 = vmatpush.msra.mxu0 0.0
      %897 = vmatpush.msra.mxu0 0.0
      %898 = vmatpush.msra.mxu0 0.0
      %899 = vmatpush.msra.mxu0 0.0
      %900 = vmatpush.msra.mxu0 0.0
      %901 = vmatpush.msra.mxu0 0.0
      %902 = vmatpush.msra.mxu0 0.0
      %903 = vmatpush.msra.mxu0 0.0
      %904 = vmatpush.msra.mxu0 %v887
      %905 = vmatmul.f32.gmra.mxu0 %v863
      %v906 = vpop.f32.mrf.mxu0
      %v907 = vadd.f32 0.0, %v906
      %908 = vmatmul.f32.gmra.mxu0 %v866
      %v909 = vpop.f32.mrf.mxu0
      %v910 = vadd.f32 0.0, %v909
      %911 = vmatmul.f32.gmra.mxu0 %v869
      %v912 = vpop.f32.mrf.mxu0
      %v913 = vadd.f32 0.0, %v912
      %914 = vmatmul.f32.gmra.mxu0 %v872
      %v915 = vpop.f32.mrf.mxu0
      %v916 = vadd.f32 0.0, %v915
      %917 = vmatmul.f32.gmra.mxu0 %v875
      %v918 = vpop.f32.mrf.mxu0
      %v919 = vadd.f32 0.0, %v918
      %920 = vmatmul.f32.gmra.mxu0 %v878
      %v921 = vpop.f32.mrf.mxu0
      %v922 = vadd.f32 0.0, %v921
      %923 = vmatmul.f32.gmra.mxu0 %v881
      %v924 = vpop.f32.mrf.mxu0
      %v925 = vadd.f32 0.0, %v924
      %926 = vmatmul.f32.gmra.mxu0 %v884
      %v927 = vpop.f32.mrf.mxu0
      %v928 = vadd.f32 0.0, %v927
      %929 = vdwg.mxu0
      %s930 = scalar_lea.vmem %s2, 256
      %v931 = vld [vmem:[%s930] sm:$0xff]
      %v932 = vld [vmem:[%s930 + $0x8] sm:$0xff]
      %v933 = vld [vmem:[%s930 + $0x10] sm:$0xff]
      %v934 = vld [vmem:[%s930 + $0x18] sm:$0xff]
      %v935 = vld [vmem:[%s930 + $0x20] sm:$0xff]
      %v936 = vld [vmem:[%s930 + $0x28] sm:$0xff]
      %v937 = vld [vmem:[%s930 + $0x30] sm:$0xff]
      %v938 = vld [vmem:[%s930 + $0x38] sm:$0xff]
      %v939 = vld [vmem:[%s930 + $0x40] sm:$0xff]
      %v940 = vld [vmem:[%s930 + $0x48] sm:$0xff]
      %v941 = vld [vmem:[%s930 + $0x50] sm:$0xff]
      %v942 = vld [vmem:[%s930 + $0x58] sm:$0xff]
      %v943 = vld [vmem:[%s930 + $0x60] sm:$0xff]
      %v944 = vld [vmem:[%s930 + $0x68] sm:$0xff]
      %v945 = vld [vmem:[%s930 + $0x70] sm:$0xff]
      %v946 = vld [vmem:[%s930 + $0x78] sm:$0xff]
      %v947 = vld [vmem:[%s930 + $0x80] sm:$0xff]
      %v948 = vld [vmem:[%s930 + $0x88] sm:$0xff]
      %v949 = vld [vmem:[%s930 + $0x90] sm:$0xff]
      %v950 = vld [vmem:[%s930 + $0x98] sm:$0xff]
      %v951 = vld [vmem:[%s930 + $0xa0] sm:$0xff]
      %v952 = vld [vmem:[%s930 + $0xa8] sm:$0xff]
      %v953 = vld [vmem:[%s930 + $0xb0] sm:$0xff]
      %v954 = vld [vmem:[%s930 + $0xb8] sm:$0xff]
      %v955 = vld [vmem:[%s930 + $0xc0] sm:$0xff]
      %v956 = vld [vmem:[%s930 + $0xc8] sm:$0xff]
      %v957 = vld [vmem:[%s930 + $0xd0] sm:$0xff]
      %v958 = vld [vmem:[%s930 + $0xd8] sm:$0xff]
      %v959 = vld [vmem:[%s930 + $0xe0] sm:$0xff]
      %v960 = vld [vmem:[%s930 + $0xe8] sm:$0xff]
      %v961 = vld [vmem:[%s930 + $0xf0] sm:$0xff]
      %v962 = vld [vmem:[%s930 + $0xf8] sm:$0xff]
      %v964 = vsel %vm517, %v931, 0
      %v967 = vsel %vm517, %v932, 0
      %v970 = vsel %vm517, %v933, 0
      %v973 = vsel %vm517, %v934, 0
      %v976 = vsel %vm517, %v935, 0
      %v979 = vsel %vm517, %v936, 0
      %v982 = vsel %vm517, %v937, 0
      %v985 = vsel %vm517, %v938, 0
      %v988 = vsel %vm517, %v939, 0
      %v991 = vsel %vm517, %v940, 0
      %v994 = vsel %vm517, %v941, 0
      %v997 = vsel %vm517, %v942, 0
      %v1000 = vsel %vm517, %v943, 0
      %v1003 = vsel %vm517, %v944, 0
      %v1006 = vsel %vm517, %v945, 0
      %v1009 = vsel %vm517, %v946, 0
      %v1012 = vsel %vm517, %v947, 0
      %v1015 = vsel %vm517, %v948, 0
      %v1018 = vsel %vm517, %v949, 0
      %v1021 = vsel %vm517, %v950, 0
      %v1024 = vsel %vm517, %v951, 0
      %v1027 = vsel %vm517, %v952, 0
      %v1030 = vsel %vm517, %v953, 0
      %v1033 = vsel %vm517, %v954, 0
      %v1036 = vsel %vm517, %v955, 0
      %v1039 = vsel %vm517, %v956, 0
      %v1042 = vsel %vm517, %v957, 0
      %v1045 = vsel %vm517, %v958, 0
      %v1048 = vsel %vm517, %v959, 0
      %v1051 = vsel %vm517, %v960, 0
      %v1054 = vsel %vm517, %v961, 0
      %v1057 = vsel %vm517, %v962, 0
      %1059 = vmatpush.msra.mxu0 0.0
      %1060 = vmatpush.msra.mxu0 0.0
      %1061 = vmatpush.msra.mxu0 0.0
      %1062 = vmatpush.msra.mxu0 0.0
      %1063 = vmatpush.msra.mxu0 0.0
      %1064 = vmatpush.msra.mxu0 0.0
      %1065 = vmatpush.msra.mxu0 0.0
      %1066 = vmatpush.msra.mxu0 0.0
      %1067 = vmatpush.msra.mxu0 %v928
      %1068 = vmatpush.msra.mxu0 %v925
      %1069 = vmatpush.msra.mxu0 %v922
      %1070 = vmatpush.msra.mxu0 %v919
      %1071 = vmatpush.msra.mxu0 %v916
      %1072 = vmatpush.msra.mxu0 %v913
      %1073 = vmatpush.msra.mxu0 %v910
      %1074 = vmatpush.msra.mxu0 %v907
      %1075 = vmatmul.f32.gmra.mxu0 %v964
      %v1076 = vpop.f32.mrf.mxu0
      %v1077 = vadd.f32 0.0, %v1076
      %1078 = vmatmul.f32.gmra.mxu0 %v967
      %v1079 = vpop.f32.mrf.mxu0
      %v1080 = vadd.f32 0.0, %v1079
      %1081 = vmatmul.f32.gmra.mxu0 %v970
      %v1082 = vpop.f32.mrf.mxu0
      %v1083 = vadd.f32 0.0, %v1082
      %1084 = vmatmul.f32.gmra.mxu0 %v973
      %v1085 = vpop.f32.mrf.mxu0
      %v1086 = vadd.f32 0.0, %v1085
      %1087 = vmatmul.f32.gmra.mxu0 %v976
      %v1088 = vpop.f32.mrf.mxu0
      %v1089 = vadd.f32 0.0, %v1088
      %1090 = vmatmul.f32.gmra.mxu0 %v979
      %v1091 = vpop.f32.mrf.mxu0
      %v1092 = vadd.f32 0.0, %v1091
      %1093 = vmatmul.f32.gmra.mxu0 %v982
      %v1094 = vpop.f32.mrf.mxu0
      %v1095 = vadd.f32 0.0, %v1094
      %1096 = vmatmul.f32.gmra.mxu0 %v985
      %v1097 = vpop.f32.mrf.mxu0
      %v1098 = vadd.f32 0.0, %v1097
      %1099 = vmatmul.f32.gmra.mxu0 %v988
      %v1100 = vpop.f32.mrf.mxu0
      %v1101 = vadd.f32 0.0, %v1100
      %1102 = vmatmul.f32.gmra.mxu0 %v991
      %v1103 = vpop.f32.mrf.mxu0
      %v1104 = vadd.f32 0.0, %v1103
      %1105 = vmatmul.f32.gmra.mxu0 %v994
      %v1106 = vpop.f32.mrf.mxu0
      %v1107 = vadd.f32 0.0, %v1106
      %1108 = vmatmul.f32.gmra.mxu0 %v997
      %v1109 = vpop.f32.mrf.mxu0
      %v1110 = vadd.f32 0.0, %v1109
      %1111 = vmatmul.f32.gmra.mxu0 %v1000
      %v1112 = vpop.f32.mrf.mxu0
      %v1113 = vadd.f32 0.0, %v1112
      %1114 = vmatmul.f32.gmra.mxu0 %v1003
      %v1115 = vpop.f32.mrf.mxu0
      %v1116 = vadd.f32 0.0, %v1115
      %1117 = vmatmul.f32.gmra.mxu0 %v1006
      %v1118 = vpop.f32.mrf.mxu0
      %v1119 = vadd.f32 0.0, %v1118
      %1120 = vmatmul.f32.gmra.mxu0 %v1009
      %v1121 = vpop.f32.mrf.mxu0
      %v1122 = vadd.f32 0.0, %v1121
      %1123 = vmatmul.f32.gmra.mxu0 %v1012
      %v1124 = vpop.f32.mrf.mxu0
      %v1125 = vadd.f32 0.0, %v1124
      %1126 = vmatmul.f32.gmra.mxu0 %v1015
      %v1127 = vpop.f32.mrf.mxu0
      %v1128 = vadd.f32 0.0, %v1127
      %1129 = vmatmul.f32.gmra.mxu0 %v1018
      %v1130 = vpop.f32.mrf.mxu0
      %v1131 = vadd.f32 0.0, %v1130
      %1132 = vmatmul.f32.gmra.mxu0 %v1021
      %v1133 = vpop.f32.mrf.mxu0
      %v1134 = vadd.f32 0.0, %v1133
      %1135 = vmatmul.f32.gmra.mxu0 %v1024
      %v1136 = vpop.f32.mrf.mxu0
      %v1137 = vadd.f32 0.0, %v1136
      %1138 = vmatmul.f32.gmra.mxu0 %v1027
      %v1139 = vpop.f32.mrf.mxu0
      %v1140 = vadd.f32 0.0, %v1139
      %1141 = vmatmul.f32.gmra.mxu0 %v1030
      %v1142 = vpop.f32.mrf.mxu0
      %v1143 = vadd.f32 0.0, %v1142
      %1144 = vmatmul.f32.gmra.mxu0 %v1033
      %v1145 = vpop.f32.mrf.mxu0
      %v1146 = vadd.f32 0.0, %v1145
      %1147 = vmatmul.f32.gmra.mxu0 %v1036
      %v1148 = vpop.f32.mrf.mxu0
      %v1149 = vadd.f32 0.0, %v1148
      %1150 = vmatmul.f32.gmra.mxu0 %v1039
      %v1151 = vpop.f32.mrf.mxu0
      %v1152 = vadd.f32 0.0, %v1151
      %1153 = vmatmul.f32.gmra.mxu0 %v1042
      %v1154 = vpop.f32.mrf.mxu0
      %v1155 = vadd.f32 0.0, %v1154
      %1156 = vmatmul.f32.gmra.mxu0 %v1045
      %v1157 = vpop.f32.mrf.mxu0
      %v1158 = vadd.f32 0.0, %v1157
      %1159 = vmatmul.f32.gmra.mxu0 %v1048
      %v1160 = vpop.f32.mrf.mxu0
      %v1161 = vadd.f32 0.0, %v1160
      %1162 = vmatmul.f32.gmra.mxu0 %v1051
      %v1163 = vpop.f32.mrf.mxu0
      %v1164 = vadd.f32 0.0, %v1163
      %1165 = vmatmul.f32.gmra.mxu0 %v1054
      %v1166 = vpop.f32.mrf.mxu0
      %v1167 = vadd.f32 0.0, %v1166
      %1168 = vmatmul.f32.gmra.mxu0 %v1057
      %v1169 = vpop.f32.mrf.mxu0
      %v1170 = vadd.f32 0.0, %v1169
      %1171 = vdwg.mxu0
      %s1172 = scalar_lea.vmem %s1, 256
      %v1173 = vld [vmem:[%s1172] sm:$0xff]
      %v1174 = vld [vmem:[%s1172 + $0x8] sm:$0xff]
      %v1175 = vld [vmem:[%s1172 + $0x10] sm:$0xff]
      %v1176 = vld [vmem:[%s1172 + $0x18] sm:$0xff]
      %v1177 = vld [vmem:[%s1172 + $0x20] sm:$0xff]
      %v1178 = vld [vmem:[%s1172 + $0x28] sm:$0xff]
      %v1179 = vld [vmem:[%s1172 + $0x30] sm:$0xff]
      %v1180 = vld [vmem:[%s1172 + $0x38] sm:$0xff]
      %v1181 = vld [vmem:[%s1172 + $0x40] sm:$0xff]
      %v1182 = vld [vmem:[%s1172 + $0x48] sm:$0xff]
      %v1183 = vld [vmem:[%s1172 + $0x50] sm:$0xff]
      %v1184 = vld [vmem:[%s1172 + $0x58] sm:$0xff]
      %v1185 = vld [vmem:[%s1172 + $0x60] sm:$0xff]
      %v1186 = vld [vmem:[%s1172 + $0x68] sm:$0xff]
      %v1187 = vld [vmem:[%s1172 + $0x70] sm:$0xff]
      %v1188 = vld [vmem:[%s1172 + $0x78] sm:$0xff]
      %1189 = vmatpush.msra.mxu0 %v267
      %1190 = vmatpush.msra.mxu0 %v266
      %1191 = vmatpush.msra.mxu0 %v265
      %1192 = vmatpush.msra.mxu0 %v264
      %1193 = vmatpush.msra.mxu0 %v263
      %1194 = vmatpush.msra.mxu0 %v262
      %1195 = vmatpush.msra.mxu0 %v261
      %1196 = vmatpush.msra.mxu0 %v260
      %1197 = vmatpush.msra.mxu0 %v259
      %1198 = vmatpush.msra.mxu0 %v258
      %1199 = vmatpush.msra.mxu0 %v257
      %1200 = vmatpush.msra.mxu0 %v256
      %1201 = vmatpush.msra.mxu0 %v255
      %1202 = vmatpush.msra.mxu0 %v254
      %1203 = vmatpush.msra.mxu0 %v253
      %1204 = vmatpush.msra.mxu0 %v252
      %1205 = vmatmul.f32.gmra.mxu0 %v1173
      %v1206 = vpop.f32.mrf.mxu0
      %v1207 = vadd.f32 0.0, %v1206
      %1208 = vmatmul.f32.gmra.mxu0 %v1175
      %v1209 = vpop.f32.mrf.mxu0
      %v1210 = vadd.f32 0.0, %v1209
      %1211 = vmatmul.f32.gmra.mxu0 %v1177
      %v1212 = vpop.f32.mrf.mxu0
      %v1213 = vadd.f32 0.0, %v1212
      %1214 = vmatmul.f32.gmra.mxu0 %v1179
      %v1215 = vpop.f32.mrf.mxu0
      %v1216 = vadd.f32 0.0, %v1215
      %1217 = vmatmul.f32.gmra.mxu0 %v1181
      %v1218 = vpop.f32.mrf.mxu0
      %v1219 = vadd.f32 0.0, %v1218
      %1220 = vmatmul.f32.gmra.mxu0 %v1183
      %v1221 = vpop.f32.mrf.mxu0
      %v1222 = vadd.f32 0.0, %v1221
      %1223 = vmatmul.f32.gmra.mxu0 %v1185
      %v1224 = vpop.f32.mrf.mxu0
      %v1225 = vadd.f32 0.0, %v1224
      %1226 = vmatmul.f32.gmra.mxu0 %v1187
      %v1227 = vpop.f32.mrf.mxu0
      %v1228 = vadd.f32 0.0, %v1227
      %1229 = vdwg.mxu0
      %1230 = vmatpush.msra.mxu0 %v283
      %1231 = vmatpush.msra.mxu0 %v282
      %1232 = vmatpush.msra.mxu0 %v281
      %1233 = vmatpush.msra.mxu0 %v280
      %1234 = vmatpush.msra.mxu0 %v279
      %1235 = vmatpush.msra.mxu0 %v278
      %1236 = vmatpush.msra.mxu0 %v277
      %1237 = vmatpush.msra.mxu0 %v276
      %1238 = vmatpush.msra.mxu0 %v275
      %1239 = vmatpush.msra.mxu0 %v274
      %1240 = vmatpush.msra.mxu0 %v273
      %1241 = vmatpush.msra.mxu0 %v272
      %1242 = vmatpush.msra.mxu0 %v271
      %1243 = vmatpush.msra.mxu0 %v270
      %1244 = vmatpush.msra.mxu0 %v269
      %1245 = vmatpush.msra.mxu0 %v268
      %1246 = vmatmul.f32.gmra.mxu0 %v1174
      %v1247 = vpop.f32.mrf.mxu0
      %v1248 = vadd.f32 %v1207, %v1247
      %1249 = vmatmul.f32.gmra.mxu0 %v1176
      %v1250 = vpop.f32.mrf.mxu0
      %v1251 = vadd.f32 %v1210, %v1250
      %1252 = vmatmul.f32.gmra.mxu0 %v1178
      %v1253 = vpop.f32.mrf.mxu0
      %v1254 = vadd.f32 %v1213, %v1253
      %1255 = vmatmul.f32.gmra.mxu0 %v1180
      %v1256 = vpop.f32.mrf.mxu0
      %v1257 = vadd.f32 %v1216, %v1256
      %1258 = vmatmul.f32.gmra.mxu0 %v1182
      %v1259 = vpop.f32.mrf.mxu0
      %v1260 = vadd.f32 %v1219, %v1259
      %1261 = vmatmul.f32.gmra.mxu0 %v1184
      %v1262 = vpop.f32.mrf.mxu0
      %v1263 = vadd.f32 %v1222, %v1262
      %1264 = vmatmul.f32.gmra.mxu0 %v1186
      %v1265 = vpop.f32.mrf.mxu0
      %v1266 = vadd.f32 %v1225, %v1265
      %1267 = vmatmul.f32.gmra.mxu0 %v1188
      %v1268 = vpop.f32.mrf.mxu0
      %v1269 = vadd.f32 %v1228, %v1268
      %1270 = vdwg.mxu0
      %s1271 = scalar_lea.vmem %s3, 2
      %v1272 = vld [vmem:[%s1271] sm:$0x1]
      %v1274 = vperm.slane %v1272, 0
      %v1276 = vmul.f32 %v1248, %v1274
      %v1277 = vmul.f32 %v1251, %v1274
      %v1278 = vmul.f32 %v1254, %v1274
      %v1279 = vmul.f32 %v1257, %v1274
      %v1280 = vmul.f32 %v1260, %v1274
      %v1281 = vmul.f32 %v1263, %v1274
      %v1282 = vmul.f32 %v1266, %v1274
      %v1283 = vmul.f32 %v1269, %v1274
      %s1284 = scalar_lea.vmem %s4, 2
      %v1285 = vld [vmem:[%s1284] sm:$0x1]
      %v1287 = vperm.slane %v1285, 0
      %v1289 = vadd.f32 %v1276, %v1287
      %v1290 = vadd.f32 %v1277, %v1287
      %v1291 = vadd.f32 %v1278, %v1287
      %v1292 = vadd.f32 %v1279, %v1287
      %v1293 = vadd.f32 %v1280, %v1287
      %v1294 = vadd.f32 %v1281, %v1287
      %v1295 = vadd.f32 %v1282, %v1287
      %v1296 = vadd.f32 %v1283, %v1287
      %v1297 = vmax.f32 %v1289, 0.0
      %v1298 = vmax.f32 %v1290, 0.0
      %v1299 = vmax.f32 %v1291, 0.0
      %v1300 = vmax.f32 %v1292, 0.0
      %v1301 = vmax.f32 %v1293, 0.0
      %v1302 = vmax.f32 %v1294, 0.0
      %v1303 = vmax.f32 %v1295, 0.0
      %v1304 = vmax.f32 %v1296, 0.0
      %s1305 = scalar_lea.vmem %s5, 8
      %v1306 = vld [vmem:[%s1305] sm:$0xf]
      %v1308 = vsel %vm415, %v1297, 0
      %v1311 = vsel %vm415, %v1298, 0
      %v1314 = vsel %vm415, %v1299, 0
      %v1317 = vsel %vm415, %v1300, 0
      %v1320 = vsel %vm415, %v1301, 0
      %v1323 = vsel %vm415, %v1302, 0
      %v1326 = vsel %vm415, %v1303, 0
      %v1329 = vsel %vm415, %v1304, 0
      %v1332 = vsel %vm440, %v1306, 0
      %1334 = vmatpush.msra.mxu0 0.0
      %1335 = vmatpush.msra.mxu0 0.0
      %1336 = vmatpush.msra.mxu0 0.0
      %1337 = vmatpush.msra.mxu0 0.0
      %1338 = vmatpush.msra.mxu0 0.0
      %1339 = vmatpush.msra.mxu0 0.0
      %1340 = vmatpush.msra.mxu0 0.0
      %1341 = vmatpush.msra.mxu0 0.0
      %1342 = vmatpush.msra.mxu0 0.0
      %1343 = vmatpush.msra.mxu0 0.0
      %1344 = vmatpush.msra.mxu0 0.0
      %1345 = vmatpush.msra.mxu0 0.0
      %1346 = vmatpush.msra.mxu0 0.0
      %1347 = vmatpush.msra.mxu0 0.0
      %1348 = vmatpush.msra.mxu0 0.0
      %1349 = vmatpush.msra.mxu0 %v1332
      %1350 = vmatmul.f32.gmra.mxu0 %v1308
      %v1351 = vpop.f32.mrf.mxu0
      %v1352 = vadd.f32 0.0, %v1351
      %1353 = vmatmul.f32.gmra.mxu0 %v1311
      %v1354 = vpop.f32.mrf.mxu0
      %v1355 = vadd.f32 0.0, %v1354
      %1356 = vmatmul.f32.gmra.mxu0 %v1314
      %v1357 = vpop.f32.mrf.mxu0
      %v1358 = vadd.f32 0.0, %v1357
      %1359 = vmatmul.f32.gmra.mxu0 %v1317
      %v1360 = vpop.f32.mrf.mxu0
      %v1361 = vadd.f32 0.0, %v1360
      %1362 = vmatmul.f32.gmra.mxu0 %v1320
      %v1363 = vpop.f32.mrf.mxu0
      %v1364 = vadd.f32 0.0, %v1363
      %1365 = vmatmul.f32.gmra.mxu0 %v1323
      %v1366 = vpop.f32.mrf.mxu0
      %v1367 = vadd.f32 0.0, %v1366
      %1368 = vmatmul.f32.gmra.mxu0 %v1326
      %v1369 = vpop.f32.mrf.mxu0
      %v1370 = vadd.f32 0.0, %v1369
      %1371 = vmatmul.f32.gmra.mxu0 %v1329
      %v1372 = vpop.f32.mrf.mxu0
      %v1373 = vadd.f32 0.0, %v1372
      %1374 = vdwg.mxu0
      %s1375 = scalar_lea.vmem %s2, 512
      %v1376 = vld [vmem:[%s1375] sm:$0xff]
      %v1377 = vld [vmem:[%s1375 + $0x8] sm:$0xff]
      %v1378 = vld [vmem:[%s1375 + $0x10] sm:$0xff]
      %v1379 = vld [vmem:[%s1375 + $0x18] sm:$0xff]
      %v1380 = vld [vmem:[%s1375 + $0x20] sm:$0xff]
      %v1381 = vld [vmem:[%s1375 + $0x28] sm:$0xff]
      %v1382 = vld [vmem:[%s1375 + $0x30] sm:$0xff]
      %v1383 = vld [vmem:[%s1375 + $0x38] sm:$0xff]
      %v1384 = vld [vmem:[%s1375 + $0x40] sm:$0xff]
      %v1385 = vld [vmem:[%s1375 + $0x48] sm:$0xff]
      %v1386 = vld [vmem:[%s1375 + $0x50] sm:$0xff]
      %v1387 = vld [vmem:[%s1375 + $0x58] sm:$0xff]
      %v1388 = vld [vmem:[%s1375 + $0x60] sm:$0xff]
      %v1389 = vld [vmem:[%s1375 + $0x68] sm:$0xff]
      %v1390 = vld [vmem:[%s1375 + $0x70] sm:$0xff]
      %v1391 = vld [vmem:[%s1375 + $0x78] sm:$0xff]
      %v1392 = vld [vmem:[%s1375 + $0x80] sm:$0xff]
      %v1393 = vld [vmem:[%s1375 + $0x88] sm:$0xff]
      %v1394 = vld [vmem:[%s1375 + $0x90] sm:$0xff]
      %v1395 = vld [vmem:[%s1375 + $0x98] sm:$0xff]
      %v1396 = vld [vmem:[%s1375 + $0xa0] sm:$0xff]
      %v1397 = vld [vmem:[%s1375 + $0xa8] sm:$0xff]
      %v1398 = vld [vmem:[%s1375 + $0xb0] sm:$0xff]
      %v1399 = vld [vmem:[%s1375 + $0xb8] sm:$0xff]
      %v1400 = vld [vmem:[%s1375 + $0xc0] sm:$0xff]
      %v1401 = vld [vmem:[%s1375 + $0xc8] sm:$0xff]
      %v1402 = vld [vmem:[%s1375 + $0xd0] sm:$0xff]
      %v1403 = vld [vmem:[%s1375 + $0xd8] sm:$0xff]
      %v1404 = vld [vmem:[%s1375 + $0xe0] sm:$0xff]
      %v1405 = vld [vmem:[%s1375 + $0xe8] sm:$0xff]
      %v1406 = vld [vmem:[%s1375 + $0xf0] sm:$0xff]
      %v1407 = vld [vmem:[%s1375 + $0xf8] sm:$0xff]
      %v1409 = vsel %vm517, %v1376, 0
      %v1412 = vsel %vm517, %v1377, 0
      %v1415 = vsel %vm517, %v1378, 0
      %v1418 = vsel %vm517, %v1379, 0
      %v1421 = vsel %vm517, %v1380, 0
      %v1424 = vsel %vm517, %v1381, 0
      %v1427 = vsel %vm517, %v1382, 0
      %v1430 = vsel %vm517, %v1383, 0
      %v1433 = vsel %vm517, %v1384, 0
      %v1436 = vsel %vm517, %v1385, 0
      %v1439 = vsel %vm517, %v1386, 0
      %v1442 = vsel %vm517, %v1387, 0
      %v1445 = vsel %vm517, %v1388, 0
      %v1448 = vsel %vm517, %v1389, 0
      %v1451 = vsel %vm517, %v1390, 0
      %v1454 = vsel %vm517, %v1391, 0
      %v1457 = vsel %vm517, %v1392, 0
      %v1460 = vsel %vm517, %v1393, 0
      %v1463 = vsel %vm517, %v1394, 0
      %v1466 = vsel %vm517, %v1395, 0
      %v1469 = vsel %vm517, %v1396, 0
      %v1472 = vsel %vm517, %v1397, 0
      %v1475 = vsel %vm517, %v1398, 0
      %v1478 = vsel %vm517, %v1399, 0
      %v1481 = vsel %vm517, %v1400, 0
      %v1484 = vsel %vm517, %v1401, 0
      %v1487 = vsel %vm517, %v1402, 0
      %v1490 = vsel %vm517, %v1403, 0
      %v1493 = vsel %vm517, %v1404, 0
      %v1496 = vsel %vm517, %v1405, 0
      %v1499 = vsel %vm517, %v1406, 0
      %v1502 = vsel %vm517, %v1407, 0
      %1504 = vmatpush.msra.mxu0 0.0
      %1505 = vmatpush.msra.mxu0 0.0
      %1506 = vmatpush.msra.mxu0 0.0
      %1507 = vmatpush.msra.mxu0 0.0
      %1508 = vmatpush.msra.mxu0 0.0
      %1509 = vmatpush.msra.mxu0 0.0
      %1510 = vmatpush.msra.mxu0 0.0
      %1511 = vmatpush.msra.mxu0 0.0
      %1512 = vmatpush.msra.mxu0 %v1373
      %1513 = vmatpush.msra.mxu0 %v1370
      %1514 = vmatpush.msra.mxu0 %v1367
      %1515 = vmatpush.msra.mxu0 %v1364
      %1516 = vmatpush.msra.mxu0 %v1361
      %1517 = vmatpush.msra.mxu0 %v1358
      %1518 = vmatpush.msra.mxu0 %v1355
      %1519 = vmatpush.msra.mxu0 %v1352
      %1520 = vmatmul.f32.gmra.mxu0 %v1409
      %v1521 = vpop.f32.mrf.mxu0
      %v1522 = vadd.f32 0.0, %v1521
      %1523 = vmatmul.f32.gmra.mxu0 %v1412
      %v1524 = vpop.f32.mrf.mxu0
      %v1525 = vadd.f32 0.0, %v1524
      %1526 = vmatmul.f32.gmra.mxu0 %v1415
      %v1527 = vpop.f32.mrf.mxu0
      %v1528 = vadd.f32 0.0, %v1527
      %1529 = vmatmul.f32.gmra.mxu0 %v1418
      %v1530 = vpop.f32.mrf.mxu0
      %v1531 = vadd.f32 0.0, %v1530
      %1532 = vmatmul.f32.gmra.mxu0 %v1421
      %v1533 = vpop.f32.mrf.mxu0
      %v1534 = vadd.f32 0.0, %v1533
      %1535 = vmatmul.f32.gmra.mxu0 %v1424
      %v1536 = vpop.f32.mrf.mxu0
      %v1537 = vadd.f32 0.0, %v1536
      %1538 = vmatmul.f32.gmra.mxu0 %v1427
      %v1539 = vpop.f32.mrf.mxu0
      %v1540 = vadd.f32 0.0, %v1539
      %1541 = vmatmul.f32.gmra.mxu0 %v1430
      %v1542 = vpop.f32.mrf.mxu0
      %v1543 = vadd.f32 0.0, %v1542
      %1544 = vmatmul.f32.gmra.mxu0 %v1433
      %v1545 = vpop.f32.mrf.mxu0
      %v1546 = vadd.f32 0.0, %v1545
      %1547 = vmatmul.f32.gmra.mxu0 %v1436
      %v1548 = vpop.f32.mrf.mxu0
      %v1549 = vadd.f32 0.0, %v1548
      %1550 = vmatmul.f32.gmra.mxu0 %v1439
      %v1551 = vpop.f32.mrf.mxu0
      %v1552 = vadd.f32 0.0, %v1551
      %1553 = vmatmul.f32.gmra.mxu0 %v1442
      %v1554 = vpop.f32.mrf.mxu0
      %v1555 = vadd.f32 0.0, %v1554
      %1556 = vmatmul.f32.gmra.mxu0 %v1445
      %v1557 = vpop.f32.mrf.mxu0
      %v1558 = vadd.f32 0.0, %v1557
      %1559 = vmatmul.f32.gmra.mxu0 %v1448
      %v1560 = vpop.f32.mrf.mxu0
      %v1561 = vadd.f32 0.0, %v1560
      %1562 = vmatmul.f32.gmra.mxu0 %v1451
      %v1563 = vpop.f32.mrf.mxu0
      %v1564 = vadd.f32 0.0, %v1563
      %1565 = vmatmul.f32.gmra.mxu0 %v1454
      %v1566 = vpop.f32.mrf.mxu0
      %v1567 = vadd.f32 0.0, %v1566
      %1568 = vmatmul.f32.gmra.mxu0 %v1457
      %v1569 = vpop.f32.mrf.mxu0
      %v1570 = vadd.f32 0.0, %v1569
      %1571 = vmatmul.f32.gmra.mxu0 %v1460
      %v1572 = vpop.f32.mrf.mxu0
      %v1573 = vadd.f32 0.0, %v1572
      %1574 = vmatmul.f32.gmra.mxu0 %v1463
      %v1575 = vpop.f32.mrf.mxu0
      %v1576 = vadd.f32 0.0, %v1575
      %1577 = vmatmul.f32.gmra.mxu0 %v1466
      %v1578 = vpop.f32.mrf.mxu0
      %v1579 = vadd.f32 0.0, %v1578
      %1580 = vmatmul.f32.gmra.mxu0 %v1469
      %v1581 = vpop.f32.mrf.mxu0
      %v1582 = vadd.f32 0.0, %v1581
      %1583 = vmatmul.f32.gmra.mxu0 %v1472
      %v1584 = vpop.f32.mrf.mxu0
      %v1585 = vadd.f32 0.0, %v1584
      %1586 = vmatmul.f32.gmra.mxu0 %v1475
      %v1587 = vpop.f32.mrf.mxu0
      %v1588 = vadd.f32 0.0, %v1587
      %1589 = vmatmul.f32.gmra.mxu0 %v1478
      %v1590 = vpop.f32.mrf.mxu0
      %v1591 = vadd.f32 0.0, %v1590
      %1592 = vmatmul.f32.gmra.mxu0 %v1481
      %v1593 = vpop.f32.mrf.mxu0
      %v1594 = vadd.f32 0.0, %v1593
      %1595 = vmatmul.f32.gmra.mxu0 %v1484
      %v1596 = vpop.f32.mrf.mxu0
      %v1597 = vadd.f32 0.0, %v1596
      %1598 = vmatmul.f32.gmra.mxu0 %v1487
      %v1599 = vpop.f32.mrf.mxu0
      %v1600 = vadd.f32 0.0, %v1599
      %1601 = vmatmul.f32.gmra.mxu0 %v1490
      %v1602 = vpop.f32.mrf.mxu0
      %v1603 = vadd.f32 0.0, %v1602
      %1604 = vmatmul.f32.gmra.mxu0 %v1493
      %v1605 = vpop.f32.mrf.mxu0
      %v1606 = vadd.f32 0.0, %v1605
      %1607 = vmatmul.f32.gmra.mxu0 %v1496
      %v1608 = vpop.f32.mrf.mxu0
      %v1609 = vadd.f32 0.0, %v1608
      %1610 = vmatmul.f32.gmra.mxu0 %v1499
      %v1611 = vpop.f32.mrf.mxu0
      %v1612 = vadd.f32 0.0, %v1611
      %1613 = vmatmul.f32.gmra.mxu0 %v1502
      %v1614 = vpop.f32.mrf.mxu0
      %v1615 = vadd.f32 0.0, %v1614
      %1616 = vdwg.mxu0
      %s1617 = scalar_lea.vmem %s1, 384
      %v1618 = vld [vmem:[%s1617] sm:$0xff]
      %v1619 = vld [vmem:[%s1617 + $0x8] sm:$0xff]
      %v1620 = vld [vmem:[%s1617 + $0x10] sm:$0xff]
      %v1621 = vld [vmem:[%s1617 + $0x18] sm:$0xff]
      %v1622 = vld [vmem:[%s1617 + $0x20] sm:$0xff]
      %v1623 = vld [vmem:[%s1617 + $0x28] sm:$0xff]
      %v1624 = vld [vmem:[%s1617 + $0x30] sm:$0xff]
      %v1625 = vld [vmem:[%s1617 + $0x38] sm:$0xff]
      %v1626 = vld [vmem:[%s1617 + $0x40] sm:$0xff]
      %v1627 = vld [vmem:[%s1617 + $0x48] sm:$0xff]
      %v1628 = vld [vmem:[%s1617 + $0x50] sm:$0xff]
      %v1629 = vld [vmem:[%s1617 + $0x58] sm:$0xff]
      %v1630 = vld [vmem:[%s1617 + $0x60] sm:$0xff]
      %v1631 = vld [vmem:[%s1617 + $0x68] sm:$0xff]
      %v1632 = vld [vmem:[%s1617 + $0x70] sm:$0xff]
      %v1633 = vld [vmem:[%s1617 + $0x78] sm:$0xff]
      %1634 = vmatpush.msra.mxu0 %v267
      %1635 = vmatpush.msra.mxu0 %v266
      %1636 = vmatpush.msra.mxu0 %v265
      %1637 = vmatpush.msra.mxu0 %v264
      %1638 = vmatpush.msra.mxu0 %v263
      %1639 = vmatpush.msra.mxu0 %v262
      %1640 = vmatpush.msra.mxu0 %v261
      %1641 = vmatpush.msra.mxu0 %v260
      %1642 = vmatpush.msra.mxu0 %v259
      %1643 = vmatpush.msra.mxu0 %v258
      %1644 = vmatpush.msra.mxu0 %v257
      %1645 = vmatpush.msra.mxu0 %v256
      %1646 = vmatpush.msra.mxu0 %v255
      %1647 = vmatpush.msra.mxu0 %v254
      %1648 = vmatpush.msra.mxu0 %v253
      %1649 = vmatpush.msra.mxu0 %v252
      %1650 = vmatmul.f32.gmra.mxu0 %v1618
      %v1651 = vpop.f32.mrf.mxu0
      %v1652 = vadd.f32 0.0, %v1651
      %1653 = vmatmul.f32.gmra.mxu0 %v1620
      %v1654 = vpop.f32.mrf.mxu0
      %v1655 = vadd.f32 0.0, %v1654
      %1656 = vmatmul.f32.gmra.mxu0 %v1622
      %v1657 = vpop.f32.mrf.mxu0
      %v1658 = vadd.f32 0.0, %v1657
      %1659 = vmatmul.f32.gmra.mxu0 %v1624
      %v1660 = vpop.f32.mrf.mxu0
      %v1661 = vadd.f32 0.0, %v1660
      %1662 = vmatmul.f32.gmra.mxu0 %v1626
      %v1663 = vpop.f32.mrf.mxu0
      %v1664 = vadd.f32 0.0, %v1663
      %1665 = vmatmul.f32.gmra.mxu0 %v1628
      %v1666 = vpop.f32.mrf.mxu0
      %v1667 = vadd.f32 0.0, %v1666
      %1668 = vmatmul.f32.gmra.mxu0 %v1630
      %v1669 = vpop.f32.mrf.mxu0
      %v1670 = vadd.f32 0.0, %v1669
      %1671 = vmatmul.f32.gmra.mxu0 %v1632
      %v1672 = vpop.f32.mrf.mxu0
      %v1673 = vadd.f32 0.0, %v1672
      %1674 = vdwg.mxu0
      %1675 = vmatpush.msra.mxu0 %v283
      %1676 = vmatpush.msra.mxu0 %v282
      %1677 = vmatpush.msra.mxu0 %v281
      %1678 = vmatpush.msra.mxu0 %v280
      %1679 = vmatpush.msra.mxu0 %v279
      %1680 = vmatpush.msra.mxu0 %v278
      %1681 = vmatpush.msra.mxu0 %v277
      %1682 = vmatpush.msra.mxu0 %v276
      %1683 = vmatpush.msra.mxu0 %v275
      %1684 = vmatpush.msra.mxu0 %v274
      %1685 = vmatpush.msra.mxu0 %v273
      %1686 = vmatpush.msra.mxu0 %v272
      %1687 = vmatpush.msra.mxu0 %v271
      %1688 = vmatpush.msra.mxu0 %v270
      %1689 = vmatpush.msra.mxu0 %v269
      %1690 = vmatpush.msra.mxu0 %v268
      %1691 = vmatmul.f32.gmra.mxu0 %v1619
      %v1692 = vpop.f32.mrf.mxu0
      %v1693 = vadd.f32 %v1652, %v1692
      %1694 = vmatmul.f32.gmra.mxu0 %v1621
      %v1695 = vpop.f32.mrf.mxu0
      %v1696 = vadd.f32 %v1655, %v1695
      %1697 = vmatmul.f32.gmra.mxu0 %v1623
      %v1698 = vpop.f32.mrf.mxu0
      %v1699 = vadd.f32 %v1658, %v1698
      %1700 = vmatmul.f32.gmra.mxu0 %v1625
      %v1701 = vpop.f32.mrf.mxu0
      %v1702 = vadd.f32 %v1661, %v1701
      %1703 = vmatmul.f32.gmra.mxu0 %v1627
      %v1704 = vpop.f32.mrf.mxu0
      %v1705 = vadd.f32 %v1664, %v1704
      %1706 = vmatmul.f32.gmra.mxu0 %v1629
      %v1707 = vpop.f32.mrf.mxu0
      %v1708 = vadd.f32 %v1667, %v1707
      %1709 = vmatmul.f32.gmra.mxu0 %v1631
      %v1710 = vpop.f32.mrf.mxu0
      %v1711 = vadd.f32 %v1670, %v1710
      %1712 = vmatmul.f32.gmra.mxu0 %v1633
      %v1713 = vpop.f32.mrf.mxu0
      %v1714 = vadd.f32 %v1673, %v1713
      %1715 = vdwg.mxu0
      %s1716 = scalar_lea.vmem %s3, 3
      %v1717 = vld [vmem:[%s1716] sm:$0x1]
      %v1719 = vperm.slane %v1717, 0
      %v1721 = vmul.f32 %v1693, %v1719
      %v1722 = vmul.f32 %v1696, %v1719
      %v1723 = vmul.f32 %v1699, %v1719
      %v1724 = vmul.f32 %v1702, %v1719
      %v1725 = vmul.f32 %v1705, %v1719
      %v1726 = vmul.f32 %v1708, %v1719
      %v1727 = vmul.f32 %v1711, %v1719
      %v1728 = vmul.f32 %v1714, %v1719
      %s1729 = scalar_lea.vmem %s4, 3
      %v1730 = vld [vmem:[%s1729] sm:$0x1]
      %v1732 = vperm.slane %v1730, 0
      %v1734 = vadd.f32 %v1721, %v1732
      %v1735 = vadd.f32 %v1722, %v1732
      %v1736 = vadd.f32 %v1723, %v1732
      %v1737 = vadd.f32 %v1724, %v1732
      %v1738 = vadd.f32 %v1725, %v1732
      %v1739 = vadd.f32 %v1726, %v1732
      %v1740 = vadd.f32 %v1727, %v1732
      %v1741 = vadd.f32 %v1728, %v1732
      %v1742 = vmax.f32 %v1734, 0.0
      %v1743 = vmax.f32 %v1735, 0.0
      %v1744 = vmax.f32 %v1736, 0.0
      %v1745 = vmax.f32 %v1737, 0.0
      %v1746 = vmax.f32 %v1738, 0.0
      %v1747 = vmax.f32 %v1739, 0.0
      %v1748 = vmax.f32 %v1740, 0.0
      %v1749 = vmax.f32 %v1741, 0.0
      %s1750 = scalar_lea.vmem %s5, 12
      %v1751 = vld [vmem:[%s1750] sm:$0xf]
      %v1753 = vsel %vm415, %v1742, 0
      %v1756 = vsel %vm415, %v1743, 0
      %v1759 = vsel %vm415, %v1744, 0
      %v1762 = vsel %vm415, %v1745, 0
      %v1765 = vsel %vm415, %v1746, 0
      %v1768 = vsel %vm415, %v1747, 0
      %v1771 = vsel %vm415, %v1748, 0
      %v1774 = vsel %vm415, %v1749, 0
      %v1777 = vsel %vm440, %v1751, 0
      %1779 = vmatpush.msra.mxu0 0.0
      %1780 = vmatpush.msra.mxu0 0.0
      %1781 = vmatpush.msra.mxu0 0.0
      %1782 = vmatpush.msra.mxu0 0.0
      %1783 = vmatpush.msra.mxu0 0.0
      %1784 = vmatpush.msra.mxu0 0.0
      %1785 = vmatpush.msra.mxu0 0.0
      %1786 = vmatpush.msra.mxu0 0.0
      %1787 = vmatpush.msra.mxu0 0.0
      %1788 = vmatpush.msra.mxu0 0.0
      %1789 = vmatpush.msra.mxu0 0.0
      %1790 = vmatpush.msra.mxu0 0.0
      %1791 = vmatpush.msra.mxu0 0.0
      %1792 = vmatpush.msra.mxu0 0.0
      %1793 = vmatpush.msra.mxu0 0.0
      %1794 = vmatpush.msra.mxu0 %v1777
      %1795 = vmatmul.f32.gmra.mxu0 %v1753
      %v1796 = vpop.f32.mrf.mxu0
      %v1797 = vadd.f32 0.0, %v1796
      %1798 = vmatmul.f32.gmra.mxu0 %v1756
      %v1799 = vpop.f32.mrf.mxu0
      %v1800 = vadd.f32 0.0, %v1799
      %1801 = vmatmul.f32.gmra.mxu0 %v1759
      %v1802 = vpop.f32.mrf.mxu0
      %v1803 = vadd.f32 0.0, %v1802
      %1804 = vmatmul.f32.gmra.mxu0 %v1762
      %v1805 = vpop.f32.mrf.mxu0
      %v1806 = vadd.f32 0.0, %v1805
      %1807 = vmatmul.f32.gmra.mxu0 %v1765
      %v1808 = vpop.f32.mrf.mxu0
      %v1809 = vadd.f32 0.0, %v1808
      %1810 = vmatmul.f32.gmra.mxu0 %v1768
      %v1811 = vpop.f32.mrf.mxu0
      %v1812 = vadd.f32 0.0, %v1811
      %1813 = vmatmul.f32.gmra.mxu0 %v1771
      %v1814 = vpop.f32.mrf.mxu0
      %v1815 = vadd.f32 0.0, %v1814
      %1816 = vmatmul.f32.gmra.mxu0 %v1774
      %v1817 = vpop.f32.mrf.mxu0
      %v1818 = vadd.f32 0.0, %v1817
      %1819 = vdwg.mxu0
      %s1820 = scalar_lea.vmem %s2, 768
      %v1821 = vld [vmem:[%s1820] sm:$0xff]
      %v1822 = vld [vmem:[%s1820 + $0x8] sm:$0xff]
      %v1823 = vld [vmem:[%s1820 + $0x10] sm:$0xff]
      %v1824 = vld [vmem:[%s1820 + $0x18] sm:$0xff]
      %v1825 = vld [vmem:[%s1820 + $0x20] sm:$0xff]
      %v1826 = vld [vmem:[%s1820 + $0x28] sm:$0xff]
      %v1827 = vld [vmem:[%s1820 + $0x30] sm:$0xff]
      %v1828 = vld [vmem:[%s1820 + $0x38] sm:$0xff]
      %v1829 = vld [vmem:[%s1820 + $0x40] sm:$0xff]
      %v1830 = vld [vmem:[%s1820 + $0x48] sm:$0xff]
      %v1831 = vld [vmem:[%s1820 + $0x50] sm:$0xff]
      %v1832 = vld [vmem:[%s1820 + $0x58] sm:$0xff]
      %v1833 = vld [vmem:[%s1820 + $0x60] sm:$0xff]
      %v1834 = vld [vmem:[%s1820 + $0x68] sm:$0xff]
      %v1835 = vld [vmem:[%s1820 + $0x70] sm:$0xff]
      %v1836 = vld [vmem:[%s1820 + $0x78] sm:$0xff]
      %v1837 = vld [vmem:[%s1820 + $0x80] sm:$0xff]
      %v1838 = vld [vmem:[%s1820 + $0x88] sm:$0xff]
      %v1839 = vld [vmem:[%s1820 + $0x90] sm:$0xff]
      %v1840 = vld [vmem:[%s1820 + $0x98] sm:$0xff]
      %v1841 = vld [vmem:[%s1820 + $0xa0] sm:$0xff]
      %v1842 = vld [vmem:[%s1820 + $0xa8] sm:$0xff]
      %v1843 = vld [vmem:[%s1820 + $0xb0] sm:$0xff]
      %v1844 = vld [vmem:[%s1820 + $0xb8] sm:$0xff]
      %v1845 = vld [vmem:[%s1820 + $0xc0] sm:$0xff]
      %v1846 = vld [vmem:[%s1820 + $0xc8] sm:$0xff]
      %v1847 = vld [vmem:[%s1820 + $0xd0] sm:$0xff]
      %v1848 = vld [vmem:[%s1820 + $0xd8] sm:$0xff]
      %v1849 = vld [vmem:[%s1820 + $0xe0] sm:$0xff]
      %v1850 = vld [vmem:[%s1820 + $0xe8] sm:$0xff]
      %v1851 = vld [vmem:[%s1820 + $0xf0] sm:$0xff]
      %v1852 = vld [vmem:[%s1820 + $0xf8] sm:$0xff]
      %v1854 = vsel %vm517, %v1821, 0
      %v1857 = vsel %vm517, %v1822, 0
      %v1860 = vsel %vm517, %v1823, 0
      %v1863 = vsel %vm517, %v1824, 0
      %v1866 = vsel %vm517, %v1825, 0
      %v1869 = vsel %vm517, %v1826, 0
      %v1872 = vsel %vm517, %v1827, 0
      %v1875 = vsel %vm517, %v1828, 0
      %v1878 = vsel %vm517, %v1829, 0
      %v1881 = vsel %vm517, %v1830, 0
      %v1884 = vsel %vm517, %v1831, 0
      %v1887 = vsel %vm517, %v1832, 0
      %v1890 = vsel %vm517, %v1833, 0
      %v1893 = vsel %vm517, %v1834, 0
      %v1896 = vsel %vm517, %v1835, 0
      %v1899 = vsel %vm517, %v1836, 0
      %v1902 = vsel %vm517, %v1837, 0
      %v1905 = vsel %vm517, %v1838, 0
      %v1908 = vsel %vm517, %v1839, 0
      %v1911 = vsel %vm517, %v1840, 0
      %v1914 = vsel %vm517, %v1841, 0
      %v1917 = vsel %vm517, %v1842, 0
      %v1920 = vsel %vm517, %v1843, 0
      %v1923 = vsel %vm517, %v1844, 0
      %v1926 = vsel %vm517, %v1845, 0
      %v1929 = vsel %vm517, %v1846, 0
      %v1932 = vsel %vm517, %v1847, 0
      %v1935 = vsel %vm517, %v1848, 0
      %v1938 = vsel %vm517, %v1849, 0
      %v1941 = vsel %vm517, %v1850, 0
      %v1944 = vsel %vm517, %v1851, 0
      %v1947 = vsel %vm517, %v1852, 0
      %1949 = vmatpush.msra.mxu0 0.0
      %1950 = vmatpush.msra.mxu0 0.0
      %1951 = vmatpush.msra.mxu0 0.0
      %1952 = vmatpush.msra.mxu0 0.0
      %1953 = vmatpush.msra.mxu0 0.0
      %1954 = vmatpush.msra.mxu0 0.0
      %1955 = vmatpush.msra.mxu0 0.0
      %1956 = vmatpush.msra.mxu0 0.0
      %1957 = vmatpush.msra.mxu0 %v1818
      %1958 = vmatpush.msra.mxu0 %v1815
      %1959 = vmatpush.msra.mxu0 %v1812
      %1960 = vmatpush.msra.mxu0 %v1809
      %1961 = vmatpush.msra.mxu0 %v1806
      %1962 = vmatpush.msra.mxu0 %v1803
      %1963 = vmatpush.msra.mxu0 %v1800
      %1964 = vmatpush.msra.mxu0 %v1797
      %1965 = vmatmul.f32.gmra.mxu0 %v1854
      %v1966 = vpop.f32.mrf.mxu0
      %v1967 = vadd.f32 0.0, %v1966
      %1968 = vmatmul.f32.gmra.mxu0 %v1857
      %v1969 = vpop.f32.mrf.mxu0
      %v1970 = vadd.f32 0.0, %v1969
      %1971 = vmatmul.f32.gmra.mxu0 %v1860
      %v1972 = vpop.f32.mrf.mxu0
      %v1973 = vadd.f32 0.0, %v1972
      %1974 = vmatmul.f32.gmra.mxu0 %v1863
      %v1975 = vpop.f32.mrf.mxu0
      %v1976 = vadd.f32 0.0, %v1975
      %1977 = vmatmul.f32.gmra.mxu0 %v1866
      %v1978 = vpop.f32.mrf.mxu0
      %v1979 = vadd.f32 0.0, %v1978
      %1980 = vmatmul.f32.gmra.mxu0 %v1869
      %v1981 = vpop.f32.mrf.mxu0
      %v1982 = vadd.f32 0.0, %v1981
      %1983 = vmatmul.f32.gmra.mxu0 %v1872
      %v1984 = vpop.f32.mrf.mxu0
      %v1985 = vadd.f32 0.0, %v1984
      %1986 = vmatmul.f32.gmra.mxu0 %v1875
      %v1987 = vpop.f32.mrf.mxu0
      %v1988 = vadd.f32 0.0, %v1987
      %1989 = vmatmul.f32.gmra.mxu0 %v1878
      %v1990 = vpop.f32.mrf.mxu0
      %v1991 = vadd.f32 0.0, %v1990
      %1992 = vmatmul.f32.gmra.mxu0 %v1881
      %v1993 = vpop.f32.mrf.mxu0
      %v1994 = vadd.f32 0.0, %v1993
      %1995 = vmatmul.f32.gmra.mxu0 %v1884
      %v1996 = vpop.f32.mrf.mxu0
      %v1997 = vadd.f32 0.0, %v1996
      %1998 = vmatmul.f32.gmra.mxu0 %v1887
      %v1999 = vpop.f32.mrf.mxu0
      %v2000 = vadd.f32 0.0, %v1999
      %2001 = vmatmul.f32.gmra.mxu0 %v1890
      %v2002 = vpop.f32.mrf.mxu0
      %v2003 = vadd.f32 0.0, %v2002
      %2004 = vmatmul.f32.gmra.mxu0 %v1893
      %v2005 = vpop.f32.mrf.mxu0
      %v2006 = vadd.f32 0.0, %v2005
      %2007 = vmatmul.f32.gmra.mxu0 %v1896
      %v2008 = vpop.f32.mrf.mxu0
      %v2009 = vadd.f32 0.0, %v2008
      %2010 = vmatmul.f32.gmra.mxu0 %v1899
      %v2011 = vpop.f32.mrf.mxu0
      %v2012 = vadd.f32 0.0, %v2011
      %2013 = vmatmul.f32.gmra.mxu0 %v1902
      %v2014 = vpop.f32.mrf.mxu0
      %v2015 = vadd.f32 0.0, %v2014
      %2016 = vmatmul.f32.gmra.mxu0 %v1905
      %v2017 = vpop.f32.mrf.mxu0
      %v2018 = vadd.f32 0.0, %v2017
      %2019 = vmatmul.f32.gmra.mxu0 %v1908
      %v2020 = vpop.f32.mrf.mxu0
      %v2021 = vadd.f32 0.0, %v2020
      %2022 = vmatmul.f32.gmra.mxu0 %v1911
      %v2023 = vpop.f32.mrf.mxu0
      %v2024 = vadd.f32 0.0, %v2023
      %2025 = vmatmul.f32.gmra.mxu0 %v1914
      %v2026 = vpop.f32.mrf.mxu0
      %v2027 = vadd.f32 0.0, %v2026
      %2028 = vmatmul.f32.gmra.mxu0 %v1917
      %v2029 = vpop.f32.mrf.mxu0
      %v2030 = vadd.f32 0.0, %v2029
      %2031 = vmatmul.f32.gmra.mxu0 %v1920
      %v2032 = vpop.f32.mrf.mxu0
      %v2033 = vadd.f32 0.0, %v2032
      %2034 = vmatmul.f32.gmra.mxu0 %v1923
      %v2035 = vpop.f32.mrf.mxu0
      %v2036 = vadd.f32 0.0, %v2035
      %2037 = vmatmul.f32.gmra.mxu0 %v1926
      %v2038 = vpop.f32.mrf.mxu0
      %v2039 = vadd.f32 0.0, %v2038
      %2040 = vmatmul.f32.gmra.mxu0 %v1929
      %v2041 = vpop.f32.mrf.mxu0
      %v2042 = vadd.f32 0.0, %v2041
      %2043 = vmatmul.f32.gmra.mxu0 %v1932
      %v2044 = vpop.f32.mrf.mxu0
      %v2045 = vadd.f32 0.0, %v2044
      %2046 = vmatmul.f32.gmra.mxu0 %v1935
      %v2047 = vpop.f32.mrf.mxu0
      %v2048 = vadd.f32 0.0, %v2047
      %2049 = vmatmul.f32.gmra.mxu0 %v1938
      %v2050 = vpop.f32.mrf.mxu0
      %v2051 = vadd.f32 0.0, %v2050
      %2052 = vmatmul.f32.gmra.mxu0 %v1941
      %v2053 = vpop.f32.mrf.mxu0
      %v2054 = vadd.f32 0.0, %v2053
      %2055 = vmatmul.f32.gmra.mxu0 %v1944
      %v2056 = vpop.f32.mrf.mxu0
      %v2057 = vadd.f32 0.0, %v2056
      %2058 = vmatmul.f32.gmra.mxu0 %v1947
      %v2059 = vpop.f32.mrf.mxu0
      %v2060 = vadd.f32 0.0, %v2059
      %2061 = vdwg.mxu0
      %2094 = vrot.lane.b32.xlu0 %v1077, 1
      %v2095 = vpop.permute.xlu0 %2094
      %2096 = vrot.lane.b32.xlu0 %v1080, 1
      %v2097 = vpop.permute.xlu0 %2096
      %2098 = vrot.lane.b32.xlu0 %v1083, 1
      %v2099 = vpop.permute.xlu0 %2098
      %2100 = vrot.lane.b32.xlu0 %v1086, 1
      %v2101 = vpop.permute.xlu0 %2100
      %2102 = vrot.lane.b32.xlu0 %v1089, 1
      %v2103 = vpop.permute.xlu0 %2102
      %2104 = vrot.lane.b32.xlu0 %v1092, 1
      %v2105 = vpop.permute.xlu0 %2104
      %2106 = vrot.lane.b32.xlu0 %v1095, 1
      %v2107 = vpop.permute.xlu0 %2106
      %2108 = vrot.lane.b32.xlu0 %v1098, 1
      %v2109 = vpop.permute.xlu0 %2108
      %2110 = vrot.lane.b32.xlu0 %v1101, 1
      %v2111 = vpop.permute.xlu0 %2110
      %2112 = vrot.lane.b32.xlu0 %v1104, 1
      %v2113 = vpop.permute.xlu0 %2112
      %2114 = vrot.lane.b32.xlu0 %v1107, 1
      %v2115 = vpop.permute.xlu0 %2114
      %2116 = vrot.lane.b32.xlu0 %v1110, 1
      %v2117 = vpop.permute.xlu0 %2116
      %2118 = vrot.lane.b32.xlu0 %v1113, 1
      %v2119 = vpop.permute.xlu0 %2118
      %2120 = vrot.lane.b32.xlu0 %v1116, 1
      %v2121 = vpop.permute.xlu0 %2120
      %2122 = vrot.lane.b32.xlu0 %v1119, 1
      %v2123 = vpop.permute.xlu0 %2122
      %2124 = vrot.lane.b32.xlu0 %v1122, 1
      %v2125 = vpop.permute.xlu0 %2124
      %2126 = vrot.lane.b32.xlu0 %v1125, 1
      %v2127 = vpop.permute.xlu0 %2126
      %2128 = vrot.lane.b32.xlu0 %v1128, 1
      %v2129 = vpop.permute.xlu0 %2128
      %2130 = vrot.lane.b32.xlu0 %v1131, 1
      %v2131 = vpop.permute.xlu0 %2130
      %2132 = vrot.lane.b32.xlu0 %v1134, 1
      %v2133 = vpop.permute.xlu0 %2132
      %2134 = vrot.lane.b32.xlu0 %v1137, 1
      %v2135 = vpop.permute.xlu0 %2134
      %2136 = vrot.lane.b32.xlu0 %v1140, 1
      %v2137 = vpop.permute.xlu0 %2136
      %2138 = vrot.lane.b32.xlu0 %v1143, 1
      %v2139 = vpop.permute.xlu0 %2138
      %2140 = vrot.lane.b32.xlu0 %v1146, 1
      %v2141 = vpop.permute.xlu0 %2140
      %2142 = vrot.lane.b32.xlu0 %v1149, 1
      %v2143 = vpop.permute.xlu0 %2142
      %2144 = vrot.lane.b32.xlu0 %v1152, 1
      %v2145 = vpop.permute.xlu0 %2144
      %2146 = vrot.lane.b32.xlu0 %v1155, 1
      %v2147 = vpop.permute.xlu0 %2146
      %2148 = vrot.lane.b32.xlu0 %v1158, 1
      %v2149 = vpop.permute.xlu0 %2148
      %2150 = vrot.lane.b32.xlu0 %v1161, 1
      %v2151 = vpop.permute.xlu0 %2150
      %2152 = vrot.lane.b32.xlu0 %v1164, 1
      %v2153 = vpop.permute.xlu0 %2152
      %2154 = vrot.lane.b32.xlu0 %v1167, 1
      %v2155 = vpop.permute.xlu0 %2154
      %2156 = vrot.lane.b32.xlu0 %v1170, 1
      %v2157 = vpop.permute.xlu0 %2156
      %2222 = vrot.lane.b32.xlu0 %v1522, 2
      %v2223 = vpop.permute.xlu0 %2222
      %2224 = vrot.lane.b32.xlu0 %v1525, 2
      %v2225 = vpop.permute.xlu0 %2224
      %2226 = vrot.lane.b32.xlu0 %v1528, 2
      %v2227 = vpop.permute.xlu0 %2226
      %2228 = vrot.lane.b32.xlu0 %v1531, 2
      %v2229 = vpop.permute.xlu0 %2228
      %2230 = vrot.lane.b32.xlu0 %v1534, 2
      %v2231 = vpop.permute.xlu0 %2230
      %2232 = vrot.lane.b32.xlu0 %v1537, 2
      %v2233 = vpop.permute.xlu0 %2232
      %2234 = vrot.lane.b32.xlu0 %v1540, 2
      %v2235 = vpop.permute.xlu0 %2234
      %2236 = vrot.lane.b32.xlu0 %v1543, 2
      %v2237 = vpop.permute.xlu0 %2236
      %2238 = vrot.lane.b32.xlu0 %v1546, 2
      %v2239 = vpop.permute.xlu0 %2238
      %2240 = vrot.lane.b32.xlu0 %v1549, 2
      %v2241 = vpop.permute.xlu0 %2240
      %2242 = vrot.lane.b32.xlu0 %v1552, 2
      %v2243 = vpop.permute.xlu0 %2242
      %2244 = vrot.lane.b32.xlu0 %v1555, 2
      %v2245 = vpop.permute.xlu0 %2244
      %2246 = vrot.lane.b32.xlu0 %v1558, 2
      %v2247 = vpop.permute.xlu0 %2246
      %2248 = vrot.lane.b32.xlu0 %v1561, 2
      %v2249 = vpop.permute.xlu0 %2248
      %2250 = vrot.lane.b32.xlu0 %v1564, 2
      %v2251 = vpop.permute.xlu0 %2250
      %2252 = vrot.lane.b32.xlu0 %v1567, 2
      %v2253 = vpop.permute.xlu0 %2252
      %2254 = vrot.lane.b32.xlu0 %v1570, 2
      %v2255 = vpop.permute.xlu0 %2254
      %2256 = vrot.lane.b32.xlu0 %v1573, 2
      %v2257 = vpop.permute.xlu0 %2256
      %2258 = vrot.lane.b32.xlu0 %v1576, 2
      %v2259 = vpop.permute.xlu0 %2258
      %2260 = vrot.lane.b32.xlu0 %v1579, 2
      %v2261 = vpop.permute.xlu0 %2260
      %2262 = vrot.lane.b32.xlu0 %v1582, 2
      %v2263 = vpop.permute.xlu0 %2262
      %2264 = vrot.lane.b32.xlu0 %v1585, 2
      %v2265 = vpop.permute.xlu0 %2264
      %2266 = vrot.lane.b32.xlu0 %v1588, 2
      %v2267 = vpop.permute.xlu0 %2266
      %2268 = vrot.lane.b32.xlu0 %v1591, 2
      %v2269 = vpop.permute.xlu0 %2268
      %2270 = vrot.lane.b32.xlu0 %v1594, 2
      %v2271 = vpop.permute.xlu0 %2270
      %2272 = vrot.lane.b32.xlu0 %v1597, 2
      %v2273 = vpop.permute.xlu0 %2272
      %2274 = vrot.lane.b32.xlu0 %v1600, 2
      %v2275 = vpop.permute.xlu0 %2274
      %2276 = vrot.lane.b32.xlu0 %v1603, 2
      %v2277 = vpop.permute.xlu0 %2276
      %2278 = vrot.lane.b32.xlu0 %v1606, 2
      %v2279 = vpop.permute.xlu0 %2278
      %2280 = vrot.lane.b32.xlu0 %v1609, 2
      %v2281 = vpop.permute.xlu0 %2280
      %2282 = vrot.lane.b32.xlu0 %v1612, 2
      %v2283 = vpop.permute.xlu0 %2282
      %2284 = vrot.lane.b32.xlu0 %v1615, 2
      %v2285 = vpop.permute.xlu0 %2284
      %2350 = vrot.lane.b32.xlu0 %v1967, 3
      %v2351 = vpop.permute.xlu0 %2350
      %2352 = vrot.lane.b32.xlu0 %v1970, 3
      %v2353 = vpop.permute.xlu0 %2352
      %2354 = vrot.lane.b32.xlu0 %v1973, 3
      %v2355 = vpop.permute.xlu0 %2354
      %2356 = vrot.lane.b32.xlu0 %v1976, 3
      %v2357 = vpop.permute.xlu0 %2356
      %2358 = vrot.lane.b32.xlu0 %v1979, 3
      %v2359 = vpop.permute.xlu0 %2358
      %2360 = vrot.lane.b32.xlu0 %v1982, 3
      %v2361 = vpop.permute.xlu0 %2360
      %2362 = vrot.lane.b32.xlu0 %v1985, 3
      %v2363 = vpop.permute.xlu0 %2362
      %2364 = vrot.lane.b32.xlu0 %v1988, 3
      %v2365 = vpop.permute.xlu0 %2364
      %2366 = vrot.lane.b32.xlu0 %v1991, 3
      %v2367 = vpop.permute.xlu0 %2366
      %2368 = vrot.lane.b32.xlu0 %v1994, 3
      %v2369 = vpop.permute.xlu0 %2368
      %2370 = vrot.lane.b32.xlu0 %v1997, 3
      %v2371 = vpop.permute.xlu0 %2370
      %2372 = vrot.lane.b32.xlu0 %v2000, 3
      %v2373 = vpop.permute.xlu0 %2372
      %2374 = vrot.lane.b32.xlu0 %v2003, 3
      %v2375 = vpop.permute.xlu0 %2374
      %2376 = vrot.lane.b32.xlu0 %v2006, 3
      %v2377 = vpop.permute.xlu0 %2376
      %2378 = vrot.lane.b32.xlu0 %v2009, 3
      %v2379 = vpop.permute.xlu0 %2378
      %2380 = vrot.lane.b32.xlu0 %v2012, 3
      %v2381 = vpop.permute.xlu0 %2380
      %2382 = vrot.lane.b32.xlu0 %v2015, 3
      %v2383 = vpop.permute.xlu0 %2382
      %2384 = vrot.lane.b32.xlu0 %v2018, 3
      %v2385 = vpop.permute.xlu0 %2384
      %2386 = vrot.lane.b32.xlu0 %v2021, 3
      %v2387 = vpop.permute.xlu0 %2386
      %2388 = vrot.lane.b32.xlu0 %v2024, 3
      %v2389 = vpop.permute.xlu0 %2388
      %2390 = vrot.lane.b32.xlu0 %v2027, 3
      %v2391 = vpop.permute.xlu0 %2390
      %2392 = vrot.lane.b32.xlu0 %v2030, 3
      %v2393 = vpop.permute.xlu0 %2392
      %2394 = vrot.lane.b32.xlu0 %v2033, 3
      %v2395 = vpop.permute.xlu0 %2394
      %2396 = vrot.lane.b32.xlu0 %v2036, 3
      %v2397 = vpop.permute.xlu0 %2396
      %2398 = vrot.lane.b32.xlu0 %v2039, 3
      %v2399 = vpop.permute.xlu0 %2398
      %2400 = vrot.lane.b32.xlu0 %v2042, 3
      %v2401 = vpop.permute.xlu0 %2400
      %2402 = vrot.lane.b32.xlu0 %v2045, 3
      %v2403 = vpop.permute.xlu0 %2402
      %2404 = vrot.lane.b32.xlu0 %v2048, 3
      %v2405 = vpop.permute.xlu0 %2404
      %2406 = vrot.lane.b32.xlu0 %v2051, 3
      %v2407 = vpop.permute.xlu0 %2406
      %2408 = vrot.lane.b32.xlu0 %v2054, 3
      %v2409 = vpop.permute.xlu0 %2408
      %2410 = vrot.lane.b32.xlu0 %v2057, 3
      %v2411 = vpop.permute.xlu0 %2410
      %2412 = vrot.lane.b32.xlu0 %v2060, 3
      %v2413 = vpop.permute.xlu0 %2412
      %2478 = vrot.lane.b32.xlu0 %v252, 4
      %v2479 = vpop.permute.xlu0 %2478
      %2480 = vrot.lane.b32.xlu0 %v253, 4
      %v2481 = vpop.permute.xlu0 %2480
      %2482 = vrot.lane.b32.xlu0 %v254, 4
      %v2483 = vpop.permute.xlu0 %2482
      %2484 = vrot.lane.b32.xlu0 %v255, 4
      %v2485 = vpop.permute.xlu0 %2484
      %2486 = vrot.lane.b32.xlu0 %v256, 4
      %v2487 = vpop.permute.xlu0 %2486
      %2488 = vrot.lane.b32.xlu0 %v257, 4
      %v2489 = vpop.permute.xlu0 %2488
      %2490 = vrot.lane.b32.xlu0 %v258, 4
      %v2491 = vpop.permute.xlu0 %2490
      %2492 = vrot.lane.b32.xlu0 %v259, 4
      %v2493 = vpop.permute.xlu0 %2492
      %2494 = vrot.lane.b32.xlu0 %v260, 4
      %v2495 = vpop.permute.xlu0 %2494
      %2496 = vrot.lane.b32.xlu0 %v261, 4
      %v2497 = vpop.permute.xlu0 %2496
      %2498 = vrot.lane.b32.xlu0 %v262, 4
      %v2499 = vpop.permute.xlu0 %2498
      %2500 = vrot.lane.b32.xlu0 %v263, 4
      %v2501 = vpop.permute.xlu0 %2500
      %2502 = vrot.lane.b32.xlu0 %v264, 4
      %v2503 = vpop.permute.xlu0 %2502
      %2504 = vrot.lane.b32.xlu0 %v265, 4
      %v2505 = vpop.permute.xlu0 %2504
      %2506 = vrot.lane.b32.xlu0 %v266, 4
      %v2507 = vpop.permute.xlu0 %2506
      %2508 = vrot.lane.b32.xlu0 %v267, 4
      %v2509 = vpop.permute.xlu0 %2508
      %2510 = vrot.lane.b32.xlu0 %v268, 4
      %v2511 = vpop.permute.xlu0 %2510
      %2512 = vrot.lane.b32.xlu0 %v269, 4
      %v2513 = vpop.permute.xlu0 %2512
      %2514 = vrot.lane.b32.xlu0 %v270, 4
      %v2515 = vpop.permute.xlu0 %2514
      %2516 = vrot.lane.b32.xlu0 %v271, 4
      %v2517 = vpop.permute.xlu0 %2516
      %2518 = vrot.lane.b32.xlu0 %v272, 4
      %v2519 = vpop.permute.xlu0 %2518
      %2520 = vrot.lane.b32.xlu0 %v273, 4
      %v2521 = vpop.permute.xlu0 %2520
      %2522 = vrot.lane.b32.xlu0 %v274, 4
      %v2523 = vpop.permute.xlu0 %2522
      %2524 = vrot.lane.b32.xlu0 %v275, 4
      %v2525 = vpop.permute.xlu0 %2524
      %2526 = vrot.lane.b32.xlu0 %v276, 4
      %v2527 = vpop.permute.xlu0 %2526
      %2528 = vrot.lane.b32.xlu0 %v277, 4
      %v2529 = vpop.permute.xlu0 %2528
      %2530 = vrot.lane.b32.xlu0 %v278, 4
      %v2531 = vpop.permute.xlu0 %2530
      %2532 = vrot.lane.b32.xlu0 %v279, 4
      %v2533 = vpop.permute.xlu0 %2532
      %2534 = vrot.lane.b32.xlu0 %v280, 4
      %v2535 = vpop.permute.xlu0 %2534
      %2536 = vrot.lane.b32.xlu0 %v281, 4
      %v2537 = vpop.permute.xlu0 %2536
      %2538 = vrot.lane.b32.xlu0 %v282, 4
      %v2539 = vpop.permute.xlu0 %2538
      %2540 = vrot.lane.b32.xlu0 %v283, 4
      %v2541 = vpop.permute.xlu0 %2540
      %vm2574 = vcmask 7168
      %v2575 = vsel %vm2574, %v632, %v2095
      %v2576 = vsel %vm2574, %v635, %v2097
      %v2577 = vsel %vm2574, %v638, %v2099
      %v2578 = vsel %vm2574, %v641, %v2101
      %v2579 = vsel %vm2574, %v644, %v2103
      %v2580 = vsel %vm2574, %v647, %v2105
      %v2581 = vsel %vm2574, %v650, %v2107
      %v2582 = vsel %vm2574, %v653, %v2109
      %v2583 = vsel %vm2574, %v656, %v2111
      %v2584 = vsel %vm2574, %v659, %v2113
      %v2585 = vsel %vm2574, %v662, %v2115
      %v2586 = vsel %vm2574, %v665, %v2117
      %v2587 = vsel %vm2574, %v668, %v2119
      %v2588 = vsel %vm2574, %v671, %v2121
      %v2589 = vsel %vm2574, %v674, %v2123
      %v2590 = vsel %vm2574, %v677, %v2125
      %v2591 = vsel %vm2574, %v680, %v2127
      %v2592 = vsel %vm2574, %v683, %v2129
      %v2593 = vsel %vm2574, %v686, %v2131
      %v2594 = vsel %vm2574, %v689, %v2133
      %v2595 = vsel %vm2574, %v692, %v2135
      %v2596 = vsel %vm2574, %v695, %v2137
      %v2597 = vsel %vm2574, %v698, %v2139
      %v2598 = vsel %vm2574, %v701, %v2141
      %v2599 = vsel %vm2574, %v704, %v2143
      %v2600 = vsel %vm2574, %v707, %v2145
      %v2601 = vsel %vm2574, %v710, %v2147
      %v2602 = vsel %vm2574, %v713, %v2149
      %v2603 = vsel %vm2574, %v716, %v2151
      %v2604 = vsel %vm2574, %v719, %v2153
      %v2605 = vsel %vm2574, %v722, %v2155
      %v2606 = vsel %vm2574, %v725, %v2157
      %vm2607 = vcmask 15360
      %v2608 = vsel %vm2607, %v2575, %v2223
      %v2609 = vsel %vm2607, %v2576, %v2225
      %v2610 = vsel %vm2607, %v2577, %v2227
      %v2611 = vsel %vm2607, %v2578, %v2229
      %v2612 = vsel %vm2607, %v2579, %v2231
      %v2613 = vsel %vm2607, %v2580, %v2233
      %v2614 = vsel %vm2607, %v2581, %v2235
      %v2615 = vsel %vm2607, %v2582, %v2237
      %v2616 = vsel %vm2607, %v2583, %v2239
      %v2617 = vsel %vm2607, %v2584, %v2241
      %v2618 = vsel %vm2607, %v2585, %v2243
      %v2619 = vsel %vm2607, %v2586, %v2245
      %v2620 = vsel %vm2607, %v2587, %v2247
      %v2621 = vsel %vm2607, %v2588, %v2249
      %v2622 = vsel %vm2607, %v2589, %v2251
      %v2623 = vsel %vm2607, %v2590, %v2253
      %v2624 = vsel %vm2607, %v2591, %v2255
      %v2625 = vsel %vm2607, %v2592, %v2257
      %v2626 = vsel %vm2607, %v2593, %v2259
      %v2627 = vsel %vm2607, %v2594, %v2261
      %v2628 = vsel %vm2607, %v2595, %v2263
      %v2629 = vsel %vm2607, %v2596, %v2265
      %v2630 = vsel %vm2607, %v2597, %v2267
      %v2631 = vsel %vm2607, %v2598, %v2269
      %v2632 = vsel %vm2607, %v2599, %v2271
      %v2633 = vsel %vm2607, %v2600, %v2273
      %v2634 = vsel %vm2607, %v2601, %v2275
      %v2635 = vsel %vm2607, %v2602, %v2277
      %v2636 = vsel %vm2607, %v2603, %v2279
      %v2637 = vsel %vm2607, %v2604, %v2281
      %v2638 = vsel %vm2607, %v2605, %v2283
      %v2639 = vsel %vm2607, %v2606, %v2285
      %vm2640 = vcmask 23552
      %v2641 = vsel %vm2640, %v2608, %v2351
      %v2642 = vsel %vm2640, %v2609, %v2353
      %v2643 = vsel %vm2640, %v2610, %v2355
      %v2644 = vsel %vm2640, %v2611, %v2357
      %v2645 = vsel %vm2640, %v2612, %v2359
      %v2646 = vsel %vm2640, %v2613, %v2361
      %v2647 = vsel %vm2640, %v2614, %v2363
      %v2648 = vsel %vm2640, %v2615, %v2365
      %v2649 = vsel %vm2640, %v2616, %v2367
      %v2650 = vsel %vm2640, %v2617, %v2369
      %v2651 = vsel %vm2640, %v2618, %v2371
      %v2652 = vsel %vm2640, %v2619, %v2373
      %v2653 = vsel %vm2640, %v2620, %v2375
      %v2654 = vsel %vm2640, %v2621, %v2377
      %v2655 = vsel %vm2640, %v2622, %v2379
      %v2656 = vsel %vm2640, %v2623, %v2381
      %v2657 = vsel %vm2640, %v2624, %v2383
      %v2658 = vsel %vm2640, %v2625, %v2385
      %v2659 = vsel %vm2640, %v2626, %v2387
      %v2660 = vsel %vm2640, %v2627, %v2389
      %v2661 = vsel %vm2640, %v2628, %v2391
      %v2662 = vsel %vm2640, %v2629, %v2393
      %v2663 = vsel %vm2640, %v2630, %v2395
      %v2664 = vsel %vm2640, %v2631, %v2397
      %v2665 = vsel %vm2640, %v2632, %v2399
      %v2666 = vsel %vm2640, %v2633, %v2401
      %v2667 = vsel %vm2640, %v2634, %v2403
      %v2668 = vsel %vm2640, %v2635, %v2405
      %v2669 = vsel %vm2640, %v2636, %v2407
      %v2670 = vsel %vm2640, %v2637, %v2409
      %v2671 = vsel %vm2640, %v2638, %v2411
      %v2672 = vsel %vm2640, %v2639, %v2413
      %v2673 = vsel %vm415, %v2641, %v2479
      %v2674 = vsel %vm415, %v2642, %v2481
      %v2675 = vsel %vm415, %v2643, %v2483
      %v2676 = vsel %vm415, %v2644, %v2485
      %v2677 = vsel %vm415, %v2645, %v2487
      %v2678 = vsel %vm415, %v2646, %v2489
      %v2679 = vsel %vm415, %v2647, %v2491
      %v2680 = vsel %vm415, %v2648, %v2493
      %v2681 = vsel %vm415, %v2649, %v2495
      %v2682 = vsel %vm415, %v2650, %v2497
      %v2683 = vsel %vm415, %v2651, %v2499
      %v2684 = vsel %vm415, %v2652, %v2501
      %v2685 = vsel %vm415, %v2653, %v2503
      %v2686 = vsel %vm415, %v2654, %v2505
      %v2687 = vsel %vm415, %v2655, %v2507
      %v2688 = vsel %vm415, %v2656, %v2509
      %v2689 = vsel %vm415, %v2657, %v2511
      %v2690 = vsel %vm415, %v2658, %v2513
      %v2691 = vsel %vm415, %v2659, %v2515
      %v2692 = vsel %vm415, %v2660, %v2517
      %v2693 = vsel %vm415, %v2661, %v2519
      %v2694 = vsel %vm415, %v2662, %v2521
      %v2695 = vsel %vm415, %v2663, %v2523
      %v2696 = vsel %vm415, %v2664, %v2525
      %v2697 = vsel %vm415, %v2665, %v2527
      %v2698 = vsel %vm415, %v2666, %v2529
      %v2699 = vsel %vm415, %v2667, %v2531
      %v2700 = vsel %vm415, %v2668, %v2533
      %v2701 = vsel %vm415, %v2669, %v2535
      %v2702 = vsel %vm415, %v2670, %v2537
      %v2703 = vsel %vm415, %v2671, %v2539
      %v2704 = vsel %vm415, %v2672, %v2541
      %vm2705 = vcmask 64512
      %2706 = vst.msk [vmem:[%s251] sm:$0xff] %vm2705, %v2673
      %2707 = vst.msk [vmem:[%s251 + $0x8] sm:$0xff] %vm2705, %v2674
      %2708 = vst.msk [vmem:[%s251 + $0x10] sm:$0xff] %vm2705, %v2675
      %2709 = vst.msk [vmem:[%s251 + $0x18] sm:$0xff] %vm2705, %v2676
      %2710 = vst.msk [vmem:[%s251 + $0x20] sm:$0xff] %vm2705, %v2677
      %2711 = vst.msk [vmem:[%s251 + $0x28] sm:$0xff] %vm2705, %v2678
      %2712 = vst.msk [vmem:[%s251 + $0x30] sm:$0xff] %vm2705, %v2679
      %2713 = vst.msk [vmem:[%s251 + $0x38] sm:$0xff] %vm2705, %v2680
      %2714 = vst.msk [vmem:[%s251 + $0x40] sm:$0xff] %vm2705, %v2681
      %2715 = vst.msk [vmem:[%s251 + $0x48] sm:$0xff] %vm2705, %v2682
      %2716 = vst.msk [vmem:[%s251 + $0x50] sm:$0xff] %vm2705, %v2683
      %2717 = vst.msk [vmem:[%s251 + $0x58] sm:$0xff] %vm2705, %v2684
      %2718 = vst.msk [vmem:[%s251 + $0x60] sm:$0xff] %vm2705, %v2685
      %2719 = vst.msk [vmem:[%s251 + $0x68] sm:$0xff] %vm2705, %v2686
      %2720 = vst.msk [vmem:[%s251 + $0x70] sm:$0xff] %vm2705, %v2687
      %2721 = vst.msk [vmem:[%s251 + $0x78] sm:$0xff] %vm2705, %v2688
      %2722 = vst.msk [vmem:[%s251 + $0x80] sm:$0xff] %vm2705, %v2689
      %2723 = vst.msk [vmem:[%s251 + $0x88] sm:$0xff] %vm2705, %v2690
      %2724 = vst.msk [vmem:[%s251 + $0x90] sm:$0xff] %vm2705, %v2691
      %2725 = vst.msk [vmem:[%s251 + $0x98] sm:$0xff] %vm2705, %v2692
      %2726 = vst.msk [vmem:[%s251 + $0xa0] sm:$0xff] %vm2705, %v2693
      %2727 = vst.msk [vmem:[%s251 + $0xa8] sm:$0xff] %vm2705, %v2694
      %2728 = vst.msk [vmem:[%s251 + $0xb0] sm:$0xff] %vm2705, %v2695
      %2729 = vst.msk [vmem:[%s251 + $0xb8] sm:$0xff] %vm2705, %v2696
      %2730 = vst.msk [vmem:[%s251 + $0xc0] sm:$0xff] %vm2705, %v2697
      %2731 = vst.msk [vmem:[%s251 + $0xc8] sm:$0xff] %vm2705, %v2698
      %2732 = vst.msk [vmem:[%s251 + $0xd0] sm:$0xff] %vm2705, %v2699
      %2733 = vst.msk [vmem:[%s251 + $0xd8] sm:$0xff] %vm2705, %v2700
      %2734 = vst.msk [vmem:[%s251 + $0xe0] sm:$0xff] %vm2705, %v2701
      %2735 = vst.msk [vmem:[%s251 + $0xe8] sm:$0xff] %vm2705, %v2702
      %2736 = vst.msk [vmem:[%s251 + $0xf0] sm:$0xff] %vm2705, %v2703
      %2737 = vst.msk [vmem:[%s251 + $0xf8] sm:$0xff] %vm2705, %v2704
      %p2738 = scmp.lt.s32.totalorder %s17, 1
      %s2739 = scalar_select %p2738, %s17, 1
      %s2740 = smul.addr %s2739, 32
      %s2741 = smul.addr %s2740, 8
      %s2742 = scalar_lea.vmem %s6, %s2741
      // Predicated region
      $region45: #{tpu_custom_call.1} parent=43 // pred_check
        %p2743 = pneg %p166
      $region46: #{tpu_custom_call.1} parent=43 // pred_check_branch
        %2745 = sbr.rel (%p2743) target = $region48
      $region47: #{tpu_custom_call.1} parent=43 // pred_region
        _
      $region48: #{tpu_custom_call.1} parent=43 // pred_fallthru
        _
    $region44: #{tpu_custom_call.1} parent=5 // pred_fallthru
      _
    %p2746 = scmp.le.s32.totalorder 2, %s12
    // Predicated region
    $region49: #{tpu_custom_call.1} parent=5 // pred_check
      %p2747 = pneg %p2746
    $region50: #{tpu_custom_call.1} parent=5 // pred_check_branch
      %2749 = sbr.rel (%p2747) target = $region52
    $region51: #{tpu_custom_call.1} parent=5 // pred_region
      %s2750 = ssub.s32 %s12, 2
      // Predicated region
      $region53: #{tpu_custom_call.1} parent=51 // pred_check
        %p2751 = pneg %p172
      $region54: #{tpu_custom_call.1} parent=51 // pred_check_branch
        %2753 = sbr.rel (%p2751) target = $region56
      $region55: #{tpu_custom_call.1} parent=51 // pred_region
        %p2754 = scmp.lt.s32.totalorder %s18, 1
        %s2755 = scalar_select %p2754, %s18, 1
        %s2756 = smul.addr %s2755, 32
        %s2757 = smul.addr %s2756, 8
        %s2758 = scalar_lea.vmem %s6, %s2757
      $region56: #{tpu_custom_call.1} parent=51 // pred_fallthru
        _
    $region52: #{tpu_custom_call.1} parent=5 // pred_fallthru
      _
  $region6: #{tpu_custom_call.1} parent=0 // loop_footer
    %s16 = sadd.s32 1, %s12
  $region7: #{tpu_custom_call.1} parent=0 // loop_footer_branch
    %11 = sbr.rel target = $region3
  $region8: #{tpu_custom_call.1} parent=0 // loop_exit
    _

</llo_original>
